<compile_context>
chip_gen: v7x
topology: tpu7x:2x2x1
jax: 0.10.0
libtpu: 0.0.40
codegen_flags: <defaults>
</compile_context>

<pallas_src>
import functools
import math

import numpy as np
import jax
import jax.numpy as jnp
from jax.experimental import pallas as pl
from jax.experimental.pallas import tpu as pltpu

K = 4
SIGMAS = (1.0, 2.0, 3.0, 4.0)
KSIZE = 5
DILATIONS = tuple(max(1, int(s // 1)) for s in SIGMAS)   # (1, 2, 3, 4)
MAX_PAD = 2 * max(DILATIONS)                             # 8 (per-scale pad = 2*d)


def _round_up(v, m):
    return (v + m - 1) // m * m


def _gauss_1d(sigma):
    ax = [float(i - KSIZE // 2) for i in range(KSIZE)]
    g = [math.exp(-(a * a) / (2.0 * sigma * sigma)) for a in ax]
    s = sum(g)
    return tuple(v / s for v in g)


# Normalized separable 1-D Gaussian taps (outer(W1D[i], W1D[i]) == PyTorch's 5x5 kernel).
W1D = tuple(_gauss_1d(s) for s in SIGMAS)


def make_gaussian_kernels():
    """2-D kernels (K, 5, 5) — used only by the pure-JAX reference."""
    ax = jnp.arange(-(KSIZE // 2), KSIZE // 2 + 1, dtype=jnp.float32)
    xx, yy = jnp.meshgrid(ax, ax, indexing="ij")
    ks = []
    for s in SIGMAS:
        k = jnp.exp(-(xx ** 2 + yy ** 2) / (2.0 * s ** 2))
        k = k / jnp.sum(k)
        ks.append(k)
    return jnp.stack(ks, axis=0)


def _build_tap_matrix(RB):
    """Banded constant (K*RB, RB+2*MAX_PAD): row i*RB+rr holds scale i's vertical
    Gaussian taps so that T @ window computes all K vertical passes at once."""
    T = np.zeros((K * RB, RB + 2 * MAX_PAD), np.float32)
    for i in range(K):
        d = DILATIONS[i]
        for rr in range(RB):
            for ky in range(KSIZE):
                T[i * RB + rr, MAX_PAD + (ky - 2) * d + rr] += W1D[i][ky]
    return T


def _msgra_kernel(gamma_ref, tap_ref, x_hbm_ref, out_ref, xpad_ref, dma_sem,
                  *, H, W, C, RB, PAD_L, WPC):
    """One (batch, row-block) grid step.

    gamma_ref : SMEM (B*K,) f32              adaptive per-batch scale weights (flat)
    tap_ref   : VMEM (K*RB, RB+2*MAX_PAD)    banded vertical-tap matrix (constant)
    x_hbm_ref : ANY  (B, H, W*C)             image left in HBM (DMA'd manually)
    out_ref   : VMEM (1, RB, W*C)            one lane-dense row-block of the output
    xpad_ref  : VMEM (H+2*MAX_PAD, WPC)      zero-halo image, persists across r
    dma_sem   : DMA semaphore
    """
    WC = W * C
    HP = H + 2 * MAX_PAD

    b = pl.program_id(0)
    r = pl.program_id(1)

    # Build the zero-halo padded image once per batch: zero only the halo strips
    # and DMA x[b] from HBM straight into the (lane-aligned) interior rectangle.
    @pl.when(r == 0)
    def _():
        z = xpad_ref.dtype
        xpad_ref[0:MAX_PAD, :] = jnp.zeros((MAX_PAD, WPC), z)
        xpad_ref[MAX_PAD + H:, :] = jnp.zeros((HP - MAX_PAD - H, WPC), z)
        xpad_ref[:, 0:PAD_L] = jnp.zeros((HP, PAD_L), z)
        xpad_ref[:, PAD_L + WC:] = jnp.zeros((HP, WPC - PAD_L - WC), z)
        cp = pltpu.make_async_copy(
            x_hbm_ref.at[b],
            xpad_ref.at[MAX_PAD:MAX_PAD + H, PAD_L:PAD_L + WC],
            dma_sem)
        cp.start()
        cp.wait()

    row0 = pl.multiple_of(r * RB, RB)

    # One aligned window read covers every vertical tap of every scale.
    win = xpad_ref[pl.ds(row0, RB + 2 * MAX_PAD), :]          # (RB+16, WPC)
    win_f = win.astype(jnp.float32)

    # Vertical separable pass for all K scales in a single MXU matmul.
    tmp_all = jnp.dot(tap_ref[...], win_f,
                      preferred_element_type=jnp.float32)     # (K*RB, WPC)

    # Horizontal separable pass: static interior slices (zero halo keeps every
    # shifted slice in-bounds); gamma applied once per scale.
    acc = None
    for i in range(K):
        d = DILATIONS[i]
        g = gamma_ref[b * K + i]
        tmp_i = tmp_all[i * RB:(i + 1) * RB, :]
        h = None
        for kx in range(KSIZE):
            start = PAD_L + (kx - 2) * d * C
            term = W1D[i][kx] * tmp_i[:, start:start + WC]
            h = term if h is None else h + term
        contrib = g * h
        acc = contrib if acc is None else acc + contrib

    attn = jax.nn.sigmoid(acc)
    xin = win_f[MAX_PAD:MAX_PAD + RB, PAD_L:PAD_L + WC]       # reuse the window read
    out_ref[0] = (xin * (1.0 + attn)).astype(out_ref.dtype)


def msgra_pallas(x_nhwc, gamma):
    B, H, W, C = x_nhwc.shape
    if H % 32 == 0:
        RB = 32
    elif H % 16 == 0:
        RB = 16
    elif H % 8 == 0:
        RB = 8
    else:
        RB = H
    NR = H // RB
    WC = W * C
    PAD_L = _round_up(MAX_PAD * C, 128)                    # lane-aligned interior start
    WPC = _round_up(PAD_L + WC + MAX_PAD * C, 128)         # lane-aligned padded width
    HP = H + 2 * MAX_PAD

    x2 = x_nhwc.reshape(B, H, WC)                          # lane-dense last dim
    gamma_flat = gamma.reshape(-1).astype(jnp.float32)     # (B*K,) flat SMEM
    tap = jnp.asarray(_build_tap_matrix(RB))               # (K*RB, RB+2*MAX_PAD)

    itemsize = jnp.dtype(x_nhwc.dtype).itemsize
    need = (HP * WPC * itemsize                            # padded image scratch
            + (RB + 2 * MAX_PAD) * WPC * 4                 # row window (f32)
            + K * RB * WPC * 4                             # banded matmul result
            + 2 * RB * WC * itemsize                       # double-buffered out block
            + 2 * tap.size * 4)                            # tap constant
    vmem_limit = int(min(64 * 1024 * 1024,                 # v7x physical ceiling
                         max(need + (8 << 20), 32 * 1024 * 1024)))

    kernel = functools.partial(_msgra_kernel, H=H, W=W, C=C, RB=RB,
                               PAD_L=PAD_L, WPC=WPC)
    out2 = pl.pallas_call(
        kernel,
        out_shape=jax.ShapeDtypeStruct((B, H, WC), x_nhwc.dtype),
        grid=(B, NR),
        in_specs=[
            pl.BlockSpec(memory_space=pltpu.MemorySpace.SMEM),             # gamma
            pl.BlockSpec((K * RB, RB + 2 * MAX_PAD), lambda b, r: (0, 0)),  # taps
            pl.BlockSpec(memory_space=pl.ANY),                             # x in HBM
        ],
        out_specs=pl.BlockSpec((1, RB, WC), lambda b, r: (b, r, 0)),       # lane-dense
        scratch_shapes=[pltpu.VMEM((HP, WPC), x_nhwc.dtype),               # padded image
                        pltpu.SemaphoreType.DMA(())],
        compiler_params=pltpu.CompilerParams(
            dimension_semantics=("parallel", "arbitrary"),
            vmem_limit_bytes=vmem_limit),
    )(gamma_flat, tap, x2)
    return out2.reshape(B, H, W, C)


def init_params(key, C):
    """Deterministic synthetic init matching the PyTorch module's shapes."""
    hidden = max(8, C // 8)
    num_groups = min(4, hidden) if hidden > 0 else 1
    k1, k2, k3 = jax.random.split(key, 3)
    w1 = jax.random.normal(k1, (hidden, C), jnp.float32) * (1.0 / math.sqrt(C))
    gn_w = jnp.ones((hidden,), jnp.float32)
    gn_b = jnp.zeros((hidden,), jnp.float32)
    w2 = jax.random.normal(k2, (K, hidden), jnp.float32) * (1.0 / math.sqrt(hidden))
    b2 = jax.random.normal(k3, (K,), jnp.float32) * 0.1
    return dict(w1=w1, gn_w=gn_w, gn_b=gn_b, w2=w2, b2=b2,
                num_groups=num_groups, hidden=hidden)


def scale_head(gap, p):
    """1x1 conv -> GroupNorm(eps=1e-5) -> SiLU -> 1x1 conv, on (B, C) GAP features."""
    y = gap @ p["w1"].T                                  # (B, hidden)
    B, Hd = y.shape
    G = p["num_groups"]
    yg = y.reshape(B, G, Hd // G)
    mean = yg.mean(axis=-1, keepdims=True)
    var = ((yg - mean) ** 2).mean(axis=-1, keepdims=True)   # biased, like PyTorch GN
    yg = (yg - mean) / jnp.sqrt(var + 1e-5)
    y = yg.reshape(B, Hd) * p["gn_w"] + p["gn_b"]
    y = y * jax.nn.sigmoid(y)                            # SiLU
    return y @ p["w2"].T + p["b2"]                       # (B, K)


def msgra_forward(x_nchw, params):
    # TODO(synk): GAP + tiny (B,C)->(B,4) scale head stay in plain JAX; they are
    # negligible vs. the radial-conv hot path done in the Pallas kernel.
    x = jnp.transpose(x_nchw, (0, 2, 3, 1))              # NCHW -> NHWC
    gap = x.mean(axis=(1, 2))                            # (B, C)
    gamma = scale_head(gap, params)                      # (B, K)
    out = msgra_pallas(x, gamma)
    return jnp.transpose(out, (0, 3, 1, 2))              # back to NCHW


def reference_forward(x_nchw, params, gauss):
    """Pure-JAX reference mirroring the PyTorch forward (NCHW, full 2-D kernels)."""
    x = x_nchw
    B, C, H, W = x.shape
    gap = x.mean(axis=(2, 3))
    gamma = scale_head(gap, params)
    radial = jnp.zeros_like(x)
    for i in range(K):
        d = DILATIONS[i]
        pad = 2 * d
        w = jnp.broadcast_to(gauss[i][None, None], (C, 1, KSIZE, KSIZE))
        co = jax.lax.conv_general_dilated(
            x, w, window_strides=(1, 1), padding=((pad, pad), (pad, pad)),
            rhs_dilation=(d, d), feature_group_count=C,
            dimension_numbers=("NCHW", "OIHW", "NCHW"),
            precision=jax.lax.Precision.HIGHEST)
        radial = radial + gamma[:, i][:, None, None, None] * co
    attn = jax.nn.sigmoid(radial)
    return x * (1 + attn)


if __name__ == "__main__":
    key = jax.random.PRNGKey(0)
    B, C, H, W = 2, 16, 64, 32          # small; exercises 2 batches x 2 row-blocks
    kx_, kp = jax.random.split(key)
    x = jax.random.normal(kx_, (B, C, H, W), dtype=jnp.float32)
    params = init_params(kp, C)
    gauss = make_gaussian_kernels()

    out = msgra_forward(x, params)
    out = jax.block_until_ready(out)

    ref = reference_forward(x, params, gauss)
    max_err = float(jnp.max(jnp.abs(out - ref)))
    mean_err = float(jnp.mean(jnp.abs(out - ref)))
    assert out.shape == x.shape and out.dtype == x.dtype
    # Headroom for possible bf16-pass rounding of the in-kernel f32 MXU matmul;
    # structural bugs (wrong offsets/weights) produce errors orders larger.
    assert max_err < 2e-2 and mean_err < 2e-3, \
        f"mismatch vs reference: max={max_err}, mean={mean_err}"
    print("KERNEL_OK")
</pallas_src>

<mosaic_0001>
module attributes {stable_mosaic.version = 11 : i64} {
  func.func @_msgra_kernel(%arg0: i32, %arg1: i32, %arg2: memref<8xf32, #tpu.memory_space<smem>>, %arg3: memref<128x48xf32, #tpu.memory_space<vmem>>, %arg4: memref<2x64x512xf32, #tpu.memory_space<any>>, %arg5: memref<1x32x512xf32, #tpu.memory_space<vmem>>, %arg6: memref<80x768xf32, #tpu.memory_space<vmem>>, %arg7: memref<!tpu.dma_semaphore, #tpu.memory_space<semaphore_mem>>) attributes {dimension_semantics = [#tpu.dimension_semantics<parallel>, #tpu.dimension_semantics<arbitrary>], iteration_bounds = array<i64: 2, 2>, scalar_prefetch = 0 : i64, scratch_operands = 2 : i64, tpu.core_type = #tpu.core_type<tc>, window_params = [{transform_indices = @transform_0, window_bounds = array<i64: 8>}, {pipeline_mode = #tpu.pipeline_mode<synchronous>, transform_indices = @transform_1, window_bounds = array<i64: 128, 48>}, {}, {transform_indices = @transform_3, window_bounds = array<i64: 1, 32, 512>}]} {
    %c0_i32 = arith.constant 0 : i32
    %0 = arith.cmpi eq, %arg1, %c0_i32 : i32
    %1 = arith.extui %0 : i1 to i32
    %c0_i32_0 = arith.constant 0 : i32
    %2 = arith.cmpi ne, %1, %c0_i32_0 : i32
    scf.if %2 {
      %cst_32 = arith.constant 0.000000e+00 : f32
      %128 = vector.broadcast %cst_32 : f32 to vector<8x768xf32>
      %c0_33 = arith.constant 0 : index
      %c0_34 = arith.constant 0 : index
      %129 = vector.load %arg6[%c0_33, %c0_34] : memref<80x768xf32, #tpu.memory_space<vmem>>, vector<8x768xf32>
      tpu.vector_store %arg6[%c0_33, %c0_34], %128 {strides = array<i32>} : memref<80x768xf32, #tpu.memory_space<vmem>>, vector<8x768xf32>,
      %cst_35 = arith.constant 0.000000e+00 : f32
      %130 = vector.broadcast %cst_35 : f32 to vector<8x768xf32>
      %c72 = arith.constant 72 : index
      %c0_36 = arith.constant 0 : index
      %131 = vector.load %arg6[%c72, %c0_36] : memref<80x768xf32, #tpu.memory_space<vmem>>, vector<8x768xf32>
      tpu.vector_store %arg6[%c72, %c0_36], %130 {strides = array<i32>} : memref<80x768xf32, #tpu.memory_space<vmem>>, vector<8x768xf32>,
      %cst_37 = arith.constant 0.000000e+00 : f32
      %132 = vector.broadcast %cst_37 : f32 to vector<80x128xf32>
      %c0_38 = arith.constant 0 : index
      %c0_39 = arith.constant 0 : index
      %133 = vector.load %arg6[%c0_38, %c0_39] : memref<80x768xf32, #tpu.memory_space<vmem>>, vector<80x128xf32>
      tpu.vector_store %arg6[%c0_38, %c0_39], %132 {strides = array<i32>} : memref<80x768xf32, #tpu.memory_space<vmem>>, vector<80x128xf32>,
      %cst_40 = arith.constant 0.000000e+00 : f32
      %134 = vector.broadcast %cst_40 : f32 to vector<80x128xf32>
      %c0_41 = arith.constant 0 : index
      %c640 = arith.constant 640 : index
      %135 = vector.load %arg6[%c0_41, %c640] : memref<80x768xf32, #tpu.memory_space<vmem>>, vector<80x128xf32>
      tpu.vector_store %arg6[%c0_41, %c640], %134 {strides = array<i32>} : memref<80x768xf32, #tpu.memory_space<vmem>>, vector<80x128xf32>,
      %c0_i32_42 = arith.constant 0 : i32
      %c0_i32_43 = arith.constant 0 : i32
      %136 = tpu.memref_slice %arg4[%arg0, %c0_i32_42, %c0_i32_43] : memref<2x64x512xf32, #tpu.memory_space<any>> -> memref<1x64x512xf32, #tpu.memory_space<any>>
      %137 = tpu.memref_squeeze %136 : memref<1x64x512xf32, #tpu.memory_space<any>> -> memref<64x512xf32, #tpu.memory_space<any>>
      %c8_i32 = arith.constant 8 : i32
      %c128_i32 = arith.constant 128 : i32
      %138 = tpu.memref_slice %arg6[%c8_i32, %c128_i32] : memref<80x768xf32, #tpu.memory_space<vmem>> -> memref<64x512xf32, #tpu.memory_space<vmem>>
      tpu.enqueue_dma source(%137 : memref<64x512xf32, #tpu.memory_space<any>>) target(%138 : memref<64x512xf32, #tpu.memory_space<vmem>>) target_semaphore(%arg7 : memref<!tpu.dma_semaphore, #tpu.memory_space<semaphore_mem>>)
      %c0_i32_44 = arith.constant 0 : i32
      %c0_i32_45 = arith.constant 0 : i32
      %139 = tpu.memref_slice %arg4[%arg0, %c0_i32_44, %c0_i32_45] : memref<2x64x512xf32, #tpu.memory_space<any>> -> memref<1x64x512xf32, #tpu.memory_space<any>>
      %140 = tpu.memref_squeeze %139 : memref<1x64x512xf32, #tpu.memory_space<any>> -> memref<64x512xf32, #tpu.memory_space<any>>
      %c8_i32_46 = arith.constant 8 : i32
      %c128_i32_47 = arith.constant 128 : i32
      %141 = tpu.memref_slice %arg6[%c8_i32_46, %c128_i32_47] : memref<80x768xf32, #tpu.memory_space<vmem>> -> memref<64x512xf32, #tpu.memory_space<vmem>>
      tpu.wait_dma2 semaphore(%arg7 : memref<!tpu.dma_semaphore, #tpu.memory_space<semaphore_mem>>) src(%140 : memref<64x512xf32, #tpu.memory_space<any>>) dst(%141 : memref<64x512xf32, #tpu.memory_space<vmem>>)
    } else {
    }
    %c32_i32 = arith.constant 32 : i32
    %3 = arith.muli %arg1, %c32_i32 : i32
    %4 = tpu.assume_multiple %3, 32 : i32
    %5 = arith.index_cast %4 : i32 to index
    %c0 = arith.constant 0 : index
    %6 = vector.load %arg6[%5, %c0] : memref<80x768xf32, #tpu.memory_space<vmem>>, vector<48x768xf32>
    %c0_1 = arith.constant 0 : index
    %c0_2 = arith.constant 0 : index
    %7 = vector.load %arg3[%c0_1, %c0_2] : memref<128x48xf32, #tpu.memory_space<vmem>>, vector<128x48xf32>
    %cst = arith.constant dense<0.000000e+00> : vector<128x768xf32>
    %8 = tpu.matmul %7, %6, %cst {dimension_numbers = #tpu.dot_dimension_numbers<[1], [0], [0], [1], [0, 0, 1, 1], [], []>} : vector<128x48xf32>, vector<48x768xf32>, vector<128x768xf32> -> vector<128x768xf32>
    %c4_i32 = arith.constant 4 : i32
    %9 = arith.muli %arg0, %c4_i32 : i32
    %c0_i32_3 = arith.constant 0 : i32
    %10 = arith.addi %9, %c0_i32_3 : i32
    %11 = arith.index_cast %10 : i32 to index
    %12 = memref.load %arg2[%11] : memref<8xf32, #tpu.memory_space<smem>>
    %13 = vector.extract_strided_slice %8 {offsets = [0, 0], sizes = [32, 768], strides = [1, 1]} : vector<128x768xf32> to vector<32x768xf32>
    %14 = vector.extract_strided_slice %13 {offsets = [0, 96], sizes = [32, 512], strides = [1, 1]} : vector<32x768xf32> to vector<32x512xf32>
    %cst_4 = arith.constant 0.054488685 : f32
    %15 = vector.broadcast %cst_4 : f32 to vector<32x512xf32>
    %16 = arith.mulf %15, %14 : vector<32x512xf32>
    %17 = vector.extract_strided_slice %13 {offsets = [0, 112], sizes = [32, 512], strides = [1, 1]} : vector<32x768xf32> to vector<32x512xf32>
    %cst_5 = arith.constant 0.244201347 : f32
    %18 = vector.broadcast %cst_5 : f32 to vector<32x512xf32>
    %19 = arith.mulf %18, %17 : vector<32x512xf32>
    %20 = arith.addf %16, %19 : vector<32x512xf32>
    %21 = vector.extract_strided_slice %13 {offsets = [0, 128], sizes = [32, 512], strides = [1, 1]} : vector<32x768xf32> to vector<32x512xf32>
    %cst_6 = arith.constant 0.402619958 : f32
    %22 = vector.broadcast %cst_6 : f32 to vector<32x512xf32>
    %23 = arith.mulf %22, %21 : vector<32x512xf32>
    %24 = arith.addf %20, %23 : vector<32x512xf32>
    %25 = vector.extract_strided_slice %13 {offsets = [0, 144], sizes = [32, 512], strides = [1, 1]} : vector<32x768xf32> to vector<32x512xf32>
    %cst_7 = arith.constant 0.244201347 : f32
    %26 = vector.broadcast %cst_7 : f32 to vector<32x512xf32>
    %27 = arith.mulf %26, %25 : vector<32x512xf32>
    %28 = arith.addf %24, %27 : vector<32x512xf32>
    %29 = vector.extract_strided_slice %13 {offsets = [0, 160], sizes = [32, 512], strides = [1, 1]} : vector<32x768xf32> to vector<32x512xf32>
    %cst_8 = arith.constant 0.054488685 : f32
    %30 = vector.broadcast %cst_8 : f32 to vector<32x512xf32>
    %31 = arith.mulf %30, %29 : vector<32x512xf32>
    %32 = arith.addf %28, %31 : vector<32x512xf32>
    %33 = vector.broadcast %12 : f32 to vector<32x512xf32>
    %34 = arith.mulf %33, %32 : vector<32x512xf32>
    %c4_i32_9 = arith.constant 4 : i32
    %35 = arith.muli %arg0, %c4_i32_9 : i32
    %c1_i32 = arith.constant 1 : i32
    %36 = arith.addi %35, %c1_i32 : i32
    %37 = arith.index_cast %36 : i32 to index
    %38 = memref.load %arg2[%37] : memref<8xf32, #tpu.memory_space<smem>>
    %39 = vector.extract_strided_slice %8 {offsets = [32, 0], sizes = [32, 768], strides = [1, 1]} : vector<128x768xf32> to vector<32x768xf32>
    %40 = vector.extract_strided_slice %39 {offsets = [0, 64], sizes = [32, 512], strides = [1, 1]} : vector<32x768xf32> to vector<32x512xf32>
    %cst_10 = arith.constant 0.152469143 : f32
    %41 = vector.broadcast %cst_10 : f32 to vector<32x512xf32>
    %42 = arith.mulf %41, %40 : vector<32x512xf32>
    %43 = vector.extract_strided_slice %39 {offsets = [0, 96], sizes = [32, 512], strides = [1, 1]} : vector<32x768xf32> to vector<32x512xf32>
    %cst_11 = arith.constant 0.221841291 : f32
    %44 = vector.broadcast %cst_11 : f32 to vector<32x512xf32>
    %45 = arith.mulf %44, %43 : vector<32x512xf32>
    %46 = arith.addf %42, %45 : vector<32x512xf32>
    %47 = vector.extract_strided_slice %39 {offsets = [0, 128], sizes = [32, 512], strides = [1, 1]} : vector<32x768xf32> to vector<32x512xf32>
    %cst_12 = arith.constant 0.251379132 : f32
    %48 = vector.broadcast %cst_12 : f32 to vector<32x512xf32>
    %49 = arith.mulf %48, %47 : vector<32x512xf32>
    %50 = arith.addf %46, %49 : vector<32x512xf32>
    %51 = vector.extract_strided_slice %39 {offsets = [0, 160], sizes = [32, 512], strides = [1, 1]} : vector<32x768xf32> to vector<32x512xf32>
    %cst_13 = arith.constant 0.221841291 : f32
    %52 = vector.broadcast %cst_13 : f32 to vector<32x512xf32>
    %53 = arith.mulf %52, %51 : vector<32x512xf32>
    %54 = arith.addf %50, %53 : vector<32x512xf32>
    %55 = vector.extract_strided_slice %39 {offsets = [0, 192], sizes = [32, 512], strides = [1, 1]} : vector<32x768xf32> to vector<32x512xf32>
    %cst_14 = arith.constant 0.152469143 : f32
    %56 = vector.broadcast %cst_14 : f32 to vector<32x512xf32>
    %57 = arith.mulf %56, %55 : vector<32x512xf32>
    %58 = arith.addf %54, %57 : vector<32x512xf32>
    %59 = vector.broadcast %38 : f32 to vector<32x512xf32>
    %60 = arith.mulf %59, %58 : vector<32x512xf32>
    %61 = arith.addf %34, %60 : vector<32x512xf32>
    %c4_i32_15 = arith.constant 4 : i32
    %62 = arith.muli %arg0, %c4_i32_15 : i32
    %c2_i32 = arith.constant 2 : i32
    %63 = arith.addi %62, %c2_i32 : i32
    %64 = arith.index_cast %63 : i32 to index
    %65 = memref.load %arg2[%64] : memref<8xf32, #tpu.memory_space<smem>>
    %66 = vector.extract_strided_slice %8 {offsets = [64, 0], sizes = [32, 768], strides = [1, 1]} : vector<128x768xf32> to vector<32x768xf32>
    %67 = vector.extract_strided_slice %66 {offsets = [0, 32], sizes = [32, 512], strides = [1, 1]} : vector<32x768xf32> to vector<32x512xf32>
    %cst_16 = arith.constant 0.178203255 : f32
    %68 = vector.broadcast %cst_16 : f32 to vector<32x512xf32>
    %69 = arith.mulf %68, %67 : vector<32x512xf32>
    %70 = vector.extract_strided_slice %66 {offsets = [0, 80], sizes = [32, 512], strides = [1, 1]} : vector<32x768xf32> to vector<32x512xf32>
    %cst_17 = arith.constant 0.210522279 : f32
    %71 = vector.broadcast %cst_17 : f32 to vector<32x512xf32>
    %72 = arith.mulf %71, %70 : vector<32x512xf32>
    %73 = arith.addf %69, %72 : vector<32x512xf32>
    %74 = vector.extract_strided_slice %66 {offsets = [0, 128], sizes = [32, 512], strides = [1, 1]} : vector<32x768xf32> to vector<32x512xf32>
    %cst_18 = arith.constant 0.222548932 : f32
    %75 = vector.broadcast %cst_18 : f32 to vector<32x512xf32>
    %76 = arith.mulf %75, %74 : vector<32x512xf32>
    %77 = arith.addf %73, %76 : vector<32x512xf32>
    %78 = vector.extract_strided_slice %66 {offsets = [0, 176], sizes = [32, 512], strides = [1, 1]} : vector<32x768xf32> to vector<32x512xf32>
    %cst_19 = arith.constant 0.210522279 : f32
    %79 = vector.broadcast %cst_19 : f32 to vector<32x512xf32>
    %80 = arith.mulf %79, %78 : vector<32x512xf32>
    %81 = arith.addf %77, %80 : vector<32x512xf32>
    %82 = vector.extract_strided_slice %66 {offsets = [0, 224], sizes = [32, 512], strides = [1, 1]} : vector<32x768xf32> to vector<32x512xf32>
    %cst_20 = arith.constant 0.178203255 : f32
    %83 = vector.broadcast %cst_20 : f32 to vector<32x512xf32>
    %84 = arith.mulf %83, %82 : vector<32x512xf32>
    %85 = arith.addf %81, %84 : vector<32x512xf32>
    %86 = vector.broadcast %65 : f32 to vector<32x512xf32>
    %87 = arith.mulf %86, %85 : vector<32x512xf32>
    %88 = arith.addf %61, %87 : vector<32x512xf32>
    %c4_i32_21 = arith.constant 4 : i32
    %89 = arith.muli %arg0, %c4_i32_21 : i32
    %c3_i32 = arith.constant 3 : i32
    %90 = arith.addi %89, %c3_i32 : i32
    %91 = arith.index_cast %90 : i32 to index
    %92 = memref.load %arg2[%91] : memref<8xf32, #tpu.memory_space<smem>>
    %93 = vector.extract_strided_slice %8 {offsets = [96, 0], sizes = [32, 768], strides = [1, 1]} : vector<128x768xf32> to vector<32x768xf32>
    %94 = vector.extract_strided_slice %93 {offsets = [0, 0], sizes = [32, 512], strides = [1, 1]} : vector<32x768xf32> to vector<32x512xf32>
    %cst_22 = arith.constant 0.187627167 : f32
    %95 = vector.broadcast %cst_22 : f32 to vector<32x512xf32>
    %96 = arith.mulf %95, %94 : vector<32x512xf32>
    %97 = vector.extract_strided_slice %93 {offsets = [0, 64], sizes = [32, 512], strides = [1, 1]} : vector<32x768xf32> to vector<32x512xf32>
    %cst_23 = arith.constant 0.206068128 : f32
    %98 = vector.broadcast %cst_23 : f32 to vector<32x512xf32>
    %99 = arith.mulf %98, %97 : vector<32x512xf32>
    %100 = arith.addf %96, %99 : vector<32x512xf32>
    %101 = vector.extract_strided_slice %93 {offsets = [0, 128], sizes = [32, 512], strides = [1, 1]} : vector<32x768xf32> to vector<32x512xf32>
    %cst_24 = arith.constant 0.212609425 : f32
    %102 = vector.broadcast %cst_24 : f32 to vector<32x512xf32>
    %103 = arith.mulf %102, %101 : vector<32x512xf32>
    %104 = arith.addf %100, %103 : vector<32x512xf32>
    %105 = vector.extract_strided_slice %93 {offsets = [0, 192], sizes = [32, 512], strides = [1, 1]} : vector<32x768xf32> to vector<32x512xf32>
    %cst_25 = arith.constant 0.206068128 : f32
    %106 = vector.broadcast %cst_25 : f32 to vector<32x512xf32>
    %107 = arith.mulf %106, %105 : vector<32x512xf32>
    %108 = arith.addf %104, %107 : vector<32x512xf32>
    %109 = vector.extract_strided_slice %93 {offsets = [0, 256], sizes = [32, 512], strides = [1, 1]} : vector<32x768xf32> to vector<32x512xf32>
    %cst_26 = arith.constant 0.187627167 : f32
    %110 = vector.broadcast %cst_26 : f32 to vector<32x512xf32>
    %111 = arith.mulf %110, %109 : vector<32x512xf32>
    %112 = arith.addf %108, %111 : vector<32x512xf32>
    %113 = vector.broadcast %92 : f32 to vector<32x512xf32>
    %114 = arith.mulf %113, %112 : vector<32x512xf32>
    %115 = arith.addf %88, %114 : vector<32x512xf32>
    %116 = arith.negf %115 : vector<32x512xf32>
    %117 = math.exp %116 : vector<32x512xf32>
    %cst_27 = arith.constant 1.000000e+00 : f32
    %118 = vector.broadcast %cst_27 : f32 to vector<32x512xf32>
    %119 = arith.addf %118, %117 : vector<32x512xf32>
    %120 = arith.divf %118, %119 : vector<32x512xf32>
    %121 = vector.extract_strided_slice %6 {offsets = [8, 128], sizes = [32, 512], strides = [1, 1]} : vector<48x768xf32> to vector<32x512xf32>
    %cst_28 = arith.constant 1.000000e+00 : f32
    %122 = vector.broadcast %cst_28 : f32 to vector<32x512xf32>
    %123 = arith.addf %122, %120 : vector<32x512xf32>
    %124 = arith.mulf %121, %123 : vector<32x512xf32>
    %c0_29 = arith.constant 0 : index
    %c0_30 = arith.constant 0 : index
    %c0_31 = arith.constant 0 : index
    %125 = vector.load %arg5[%c0_29, %c0_30, %c0_31] : memref<1x32x512xf32, #tpu.memory_space<vmem>>, vector<1x32x512xf32>
    %126 = vector.shape_cast %125 : vector<1x32x512xf32> to vector<32x512xf32>
    %127 = vector.shape_cast %124 : vector<32x512xf32> to vector<1x32x512xf32>
    tpu.vector_store %arg5[%c0_29, %c0_30, %c0_31], %127 {strides = array<i32>} : memref<1x32x512xf32, #tpu.memory_space<vmem>>, vector<1x32x512xf32>,
    return
  }
  func.func @transform_0(%arg0: i32, %arg1: i32) -> i32 {
    %c0_i32 = arith.constant 0 : i32
    %c0_i32_0 = arith.constant 0 : i32
    return %c0_i32 : i32
  }
  func.func @transform_1(%arg0: i32, %arg1: i32) -> (i32, i32) {
    %c0_i32 = arith.constant 0 : i32
    %c0_i32_0 = arith.constant 0 : i32
    %c0_i32_1 = arith.constant 0 : i32
    return %c0_i32, %c0_i32_0 : i32, i32
  }
  func.func @transform_3(%arg0: i32, %arg1: i32) -> (i32, i32, i32) {
    %c0_i32 = arith.constant 0 : i32
    %c0_i32_0 = arith.constant 0 : i32
    return %arg0, %arg1, %c0_i32 : i32, i32, i32
  }
}

</mosaic_0001>

<llo_original>
// kernel: tpu_custom_call.1
$region0: #{tpu_custom_call.1}
  #allocation0 [shape = 'u32[]', space=smem, size = 0x4, offset = 0x4, fixed_abs, tag = 'smem constant byte address 0x4 - core index']
  #allocation1 [shape = 'u32[144,128]{1,0:T(1,128)}', space=vmem, size = 0x12000, scoped, tag = 'internal scratch']
  #allocation2 [shape = 'f32[80,768]{1,0:T(8,128)}', space=vmem, size = 0x3c000, scoped, tag = 'scratch operand']
  #allocation3 [shape = 's32[1]{0}', space=sflag, size = 0x4, scoped, tag = 'scratch operand']
  #allocation8 [shape = 's32[]', space=sflag, size = 0x4, offset = 0, fixed_abs, tag = 'sflag constant byte address 0x0 - dummy sync flag']
  %s0 = inlined_call_operand.vmem [shape: f32[8], index: 0, kind: input, shape index: {}]
  %s1 = inlined_call_operand.vmem [shape: f32[128,48], index: 1, kind: input, shape index: {}]
  %s2 = inlined_call_operand.hbm [shape: f32[2,64,512], index: 2, kind: input, shape index: {}]
  %s3 = inlined_call_operand.hbm [shape: f32[2,64,512], index: 3, kind: output, shape index: {}]
  %s4 = sld [smem:[#allocation0]]
  $region49: #{tpu_custom_call.1} parent=0
    _
  %s6 = ssub.s32 1, %s4
  %s7 = scalar_select 0, %s6, %s4
  $region1: #{tpu_custom_call.1} parent=0
    #allocation4 [shape = 'u8[512]{0}', space=smem, size = 0x200, scoped, tag = 'input window, operand 0, single buffered']
    #allocation5 [shape = 's32[2]{0}', space=sflag, size = 0x8, scoped, tag = 'scoped memory for tpu_custom_call.1']
    #allocation6 [shape = 's32[2]{0}', space=sflag, size = 0x8, scoped, tag = 'scoped memory for tpu_custom_call.1']
    #allocation7 [shape = 'u8[131072]{0}', space=vmem, size = 0x20000, scoped, tag = 'output window, operand 0']
    %8 = vsyncpa [#allocation6], 0
    %9 = vsyncpa [#allocation5], 0
    %s10 = scalar_lea.sflag [#allocation5], 1
    %11 = vsyncpa %s10, 0
    loop: start=0, step=1, limit=6
    $region2: #{tpu_custom_call.1} parent=1 // loop_pre_header
      _
    $region3: #{tpu_custom_call.1} parent=1 // loop_header
      %s13 = sphi 0, %s17
      %p14 = scmp.ge.s32.totalorder %s13, 6
      %s20 = sphi 0, %s32
      %s21 = sphi 0, %s28
      %s22 = sphi 0, %s20
      %s23 = sphi 0, %s21
      %s24 = sphi 0, %s22
      %s25 = sphi 0, %s23
      %s33 = sphi 0, %s33
      %s35 = sphi 0, %s33
      %s36 = sphi 0, %s35
      %s50 = sphi 0, %s36
      %s54 = sphi 0, %s54
      %s56 = sphi 0, %s54
      %s57 = sphi 0, %s56
      %s71 = sphi 0, %s57
      %s79 = sphi 0, %s81
      %s82 = sphi 0, %s79
      %s83 = sphi 0, %s82
      %s99 = sphi 0, %s83
    $region4: #{tpu_custom_call.1} parent=1 // loop_header_branch
      %16 = sbr.rel (%p14) target = $region8
    $region5: #{tpu_custom_call.1} parent=1 // loop_body
      %s18 = ssub.s32 %s13, 1
      %s19 = ssub.s32 %s13, 2
      %s26 = sadd.s32 1, %s21
      %p27 = scmp.ge.s32.totalorder %s26, 2
      %s28 = scalar_select %p27, 0, %s26
      %s29 = sadd.s32 1, %s20
      %s30 = scalar_select %p27, %s29, %s20
      %p31 = scmp.ge.s32.totalorder %s30, 2
      %s32 = scalar_select %p31, 0, %s30
      %s34 = sadd.s32 %s33, 1
      %p37 = scmp.eq.s32.totalorder %s13, 3
      %p38 = scmp.ne.s32.totalorder %s33, %s35
      %p39 = scmp.eq.s32.totalorder %s13, 0
      %p40 = por %p38, %p39
      %p41 = scmp.ne.s32.totalorder %s33, %s35
      %p42 = scmp.eq.s32.totalorder %s18, 3
      %p43 = por %p41, %p42
      %p44 = scmp.ne.s32.totalorder %s35, %s36
      %p45 = scmp.eq.s32.totalorder %s18, 0
      %p46 = por %p44, %p45
      %p47 = scmp.ne.s32.totalorder %s35, %s36
      %p48 = scmp.eq.s32.totalorder %s19, 3
      %p49 = por %p47, %p48
      %p51 = scmp.ne.s32.totalorder %s36, %s50
      %p52 = scmp.eq.s32.totalorder %s19, 0
      %p53 = por %p51, %p52
      %s55 = sadd.s32 %s54, 1
      %p58 = scmp.eq.s32.totalorder %s13, 3
      %p59 = scmp.ne.s32.totalorder %s54, %s56
      %p60 = scmp.eq.s32.totalorder %s13, 0
      %p61 = por %p59, %p60
      %p62 = scmp.ne.s32.totalorder %s54, %s56
      %p63 = scmp.eq.s32.totalorder %s18, 3
      %p64 = por %p62, %p63
      %p65 = scmp.ne.s32.totalorder %s56, %s57
      %p66 = scmp.eq.s32.totalorder %s18, 0
      %p67 = por %p65, %p66
      %p68 = scmp.ne.s32.totalorder %s56, %s57
      %p69 = scmp.eq.s32.totalorder %s19, 3
      %p70 = por %p68, %p69
      %p72 = scmp.ne.s32.totalorder %s57, %s71
      %p73 = scmp.eq.s32.totalorder %s19, 0
      %p74 = por %p72, %p73
      %s75 = ssub.s32 %s20, %s32
      %s76 = ssub.s32 %s21, %s28
      %s77 = sor.u32 %s75, %s76
      %p78 = scmp.eq.s32.totalorder %s77, 0
      %s80 = sadd.s32 %s79, 1
      %s81 = scalar_select %p78, %s79, %s80
      %p84 = pneg %p78
      %p85 = scmp.eq.s32.totalorder %s13, 3
      %p86 = por %p84, %p85
      %p87 = scmp.ne.s32.totalorder %s79, %s82
      %p88 = scmp.eq.s32.totalorder %s13, 0
      %p89 = por %p87, %p88
      %p90 = scmp.ne.s32.totalorder %s79, %s82
      %p91 = scmp.eq.s32.totalorder %s18, 3
      %p92 = por %p90, %p91
      %p93 = scmp.ne.s32.totalorder %s82, %s83
      %p94 = scmp.eq.s32.totalorder %s18, 0
      %p95 = por %p93, %p94
      %p96 = scmp.ne.s32.totalorder %s82, %s83
      %p97 = scmp.eq.s32.totalorder %s19, 3
      %p98 = por %p96, %p97
      %p100 = scmp.ne.s32.totalorder %s83, %s99
      %p101 = scmp.eq.s32.totalorder %s19, 0
      %p102 = por %p100, %p101
      %p103 = scmp.le.s32.totalorder 1, %s13
      %p104 = scmp.lt.s32.totalorder %s13, 5
      %p105 = pnand %p103, %p104
      %p106 = pneg %p105
      // Predicated region
      $region9: #{tpu_custom_call.1} parent=5 // pred_check
        _
      $region10: #{tpu_custom_call.1} parent=5 // pred_check_branch
        %108 = sbr.rel (%p105) target = $region12
      $region11: #{tpu_custom_call.1} parent=5 // pred_region
        %s109 = ssub.s32 %s13, 1
        // Predicated region
        $region13: #{tpu_custom_call.1} parent=11 // pred_check
          %p110 = pneg %p46
        $region14: #{tpu_custom_call.1} parent=11 // pred_check_branch
          %112 = sbr.rel (%p110) target = $region16
        $region15: #{tpu_custom_call.1} parent=11 // pred_region
          %s114 = ssub.s32 16, 16
          %115 = vsyncadd [#allocation6], %s114
          %s117 = sshll.u32 %s0, 4
          %s118 = int_to_ptr.vmem [resolvable:$true] %s117
          %120 = dma.vmem_to_smem %s118, 16, [#allocation4], [#allocation6]
        $region16: #{tpu_custom_call.1} parent=11 // pred_fallthru
          _
        // Predicated region
        $region17: #{tpu_custom_call.1} parent=11 // pred_check
          %p121 = pneg %p67
        $region18: #{tpu_custom_call.1} parent=11 // pred_check_branch
          %123 = sbr.rel (%p121) target = $region20
        $region19: #{tpu_custom_call.1} parent=11 // pred_region
          _
        $region20: #{tpu_custom_call.1} parent=11 // pred_fallthru
          _
      $region12: #{tpu_custom_call.1} parent=5 // pred_fallthru
        _
      %p124 = scmp.lt.s32.totalorder %s13, 4
      // Predicated region
      $region21: #{tpu_custom_call.1} parent=5 // pred_check
        %p125 = pneg %p124
      $region22: #{tpu_custom_call.1} parent=5 // pred_check_branch
        %127 = sbr.rel (%p125) target = $region24
      $region23: #{tpu_custom_call.1} parent=5 // pred_region
        _
      $region24: #{tpu_custom_call.1} parent=5 // pred_fallthru
        _
      %p128 = scmp.le.s32.totalorder 1, %s13
      %p129 = scmp.lt.s32.totalorder %s13, 5
      %p130 = pnand %p128, %p129
      %p131 = pneg %p130
      // Predicated region
      $region25: #{tpu_custom_call.1} parent=5 // pred_check
        _
      $region26: #{tpu_custom_call.1} parent=5 // pred_check_branch
        %133 = sbr.rel (%p130) target = $region28
      $region27: #{tpu_custom_call.1} parent=5 // pred_region
        %s134 = ssub.s32 %s13, 1
        // Predicated region
        $region29: #{tpu_custom_call.1} parent=27 // pred_check
          %p135 = pneg %p46
        $region30: #{tpu_custom_call.1} parent=27 // pred_check_branch
          %137 = sbr.rel (%p135) target = $region32
        $region31: #{tpu_custom_call.1} parent=27 // pred_region
          %138 = dma.done [#allocation6], 16
        $region32: #{tpu_custom_call.1} parent=27 // pred_fallthru
          _
        %139 = sfence
        %p140 = pneg %p46
        %p141 = pneg %p43
        %p142 = pneg %p67
        %p143 = pneg %p64
        %p144 = pneg %p95
        %p145 = pneg %p92
        %s146 = sand.u32 %s82, 1
        %s147 = scalar_lea.sflag [#allocation5], %s146
        %s148 = sand.u32 %s82, 1
        %s149 = smul.addr %s148, 128
        %s150 = scalar_lea.vmem [#allocation7], %s149
        %s151 = smul.u32 4, %s23
        %p152 = scmp.eq.s32.totalorder %s23, 0
        // Predicated region
        $region33: #{tpu_custom_call.1} parent=27 // pred_check
          %p153 = pneg %p152
        $region34: #{tpu_custom_call.1} parent=27 // pred_check_branch
          %155 = sbr.rel (%p153) target = $region36
        $region35: #{tpu_custom_call.1} parent=27 // pred_region
          %156 = vst [vmem:[#allocation2] sm:$0xff] 0.0
          %157 = vst [vmem:[#allocation2 + $0x8] sm:$0xff] 0.0
          %158 = vst [vmem:[#allocation2 + $0x10] sm:$0xff] 0.0
          %159 = vst [vmem:[#allocation2 + $0x18] sm:$0xff] 0.0
          %160 = vst [vmem:[#allocation2 + $0x20] sm:$0xff] 0.0
          %161 = vst [vmem:[#allocation2 + $0x28] sm:$0xff] 0.0
          %162 = vst [vmem:[#allocation2 + $0x1b0] sm:$0xff] 0.0
          %163 = vst [vmem:[#allocation2 + $0x1b8] sm:$0xff] 0.0
          %164 = vst [vmem:[#allocation2 + $0x1c0] sm:$0xff] 0.0
          %165 = vst [vmem:[#allocation2 + $0x1c8] sm:$0xff] 0.0
          %166 = vst [vmem:[#allocation2 + $0x1d0] sm:$0xff] 0.0
          %167 = vst [vmem:[#allocation2 + $0x1d8] sm:$0xff] 0.0
          %168 = vst [vmem:[#allocation2] sm:$0xff] 0.0
          %169 = vst [vmem:[#allocation2 + $0x30] sm:$0xff] 0.0
          %170 = vst [vmem:[#allocation2 + $0x60] sm:$0xff] 0.0
          %171 = vst [vmem:[#allocation2 + $0x90] sm:$0xff] 0.0
          %172 = vst [vmem:[#allocation2 + $0xc0] sm:$0xff] 0.0
          %173 = vst [vmem:[#allocation2 + $0xf0] sm:$0xff] 0.0
          %174 = vst [vmem:[#allocation2 + $0x120] sm:$0xff] 0.0
          %175 = vst [vmem:[#allocation2 + $0x150] sm:$0xff] 0.0
          %176 = vst [vmem:[#allocation2 + $0x180] sm:$0xff] 0.0
          %177 = vst [vmem:[#allocation2 + $0x1b0] sm:$0xff] 0.0
          %178 = vst [vmem:[#allocation2 + $0x28] sm:$0xff] 0.0
          %179 = vst [vmem:[#allocation2 + $0x58] sm:$0xff] 0.0
          %180 = vst [vmem:[#allocation2 + $0x88] sm:$0xff] 0.0
          %181 = vst [vmem:[#allocation2 + $0xb8] sm:$0xff] 0.0
          %182 = vst [vmem:[#allocation2 + $0xe8] sm:$0xff] 0.0
          %183 = vst [vmem:[#allocation2 + $0x118] sm:$0xff] 0.0
          %184 = vst [vmem:[#allocation2 + $0x148] sm:$0xff] 0.0
          %185 = vst [vmem:[#allocation2 + $0x178] sm:$0xff] 0.0
          %186 = vst [vmem:[#allocation2 + $0x1a8] sm:$0xff] 0.0
          %187 = vst [vmem:[#allocation2 + $0x1d8] sm:$0xff] 0.0
          %s188 = smul.u32 %s22, 32
          %s189 = smul.addr %s188, 128
          %s190 = scalar_lea.hbm %s2, %s189
          %s191 = scalar_lea.vmem [#allocation2], 56
          %s193 = sshll.u32 %s191, 4
          %s194 = int_to_ptr.vmem [resolvable:$true] %s193
          %196 = dma.hbm_to_vmem [thread:$0]  %s190, 4096, %s194, [#allocation3], 512, 768, 32
          %s197 = smul.u32 8, 8
          %s198 = smul.u32 %s197, 4
          %s199 = sshll.u32 %s198, 4
          %200 = dma.done [#allocation3], %s199
        $region36: #{tpu_custom_call.1} parent=27 // pred_fallthru
          _
        %s201 = smul.u32 %s23, 32
        %s202 = sshra.s32 %s201, 3
        %s203 = sand.u32 %s201, 7
        %s204 = smul.u32 %s202, 6
        %s205 = smul.addr %s204, 8
        %s206 = scalar_lea.vmem [#allocation2], %s205
        %v207 = vld [vmem:[%s206] sm:$0xff]
        %v208 = vld [vmem:[%s206 + $0x8] sm:$0xff]
        %v209 = vld [vmem:[%s206 + $0x10] sm:$0xff]
        %v210 = vld [vmem:[%s206 + $0x18] sm:$0xff]
        %v211 = vld [vmem:[%s206 + $0x20] sm:$0xff]
        %v212 = vld [vmem:[%s206 + $0x28] sm:$0xff]
        %v213 = vld [vmem:[%s206 + $0x30] sm:$0xff]
        %v214 = vld [vmem:[%s206 + $0x38] sm:$0xff]
        %v215 = vld [vmem:[%s206 + $0x40] sm:$0xff]
        %v216 = vld [vmem:[%s206 + $0x48] sm:$0xff]
        %v217 = vld [vmem:[%s206 + $0x50] sm:$0xff]
        %v218 = vld [vmem:[%s206 + $0x58] sm:$0xff]
        %v219 = vld [vmem:[%s206 + $0x60] sm:$0xff]
        %v220 = vld [vmem:[%s206 + $0x68] sm:$0xff]
        %v221 = vld [vmem:[%s206 + $0x70] sm:$0xff]
        %v222 = vld [vmem:[%s206 + $0x78] sm:$0xff]
        %v223 = vld [vmem:[%s206 + $0x80] sm:$0xff]
        %v224 = vld [vmem:[%s206 + $0x88] sm:$0xff]
        %v225 = vld [vmem:[%s206 + $0x90] sm:$0xff]
        %v226 = vld [vmem:[%s206 + $0x98] sm:$0xff]
        %v227 = vld [vmem:[%s206 + $0xa0] sm:$0xff]
        %v228 = vld [vmem:[%s206 + $0xa8] sm:$0xff]
        %v229 = vld [vmem:[%s206 + $0xb0] sm:$0xff]
        %v230 = vld [vmem:[%s206 + $0xb8] sm:$0xff]
        %v231 = vld [vmem:[%s206 + $0xc0] sm:$0xff]
        %v232 = vld [vmem:[%s206 + $0xc8] sm:$0xff]
        %v233 = vld [vmem:[%s206 + $0xd0] sm:$0xff]
        %v234 = vld [vmem:[%s206 + $0xd8] sm:$0xff]
        %v235 = vld [vmem:[%s206 + $0xe0] sm:$0xff]
        %v236 = vld [vmem:[%s206 + $0xe8] sm:$0xff]
        %v237 = vld [vmem:[%s206 + $0xf0] sm:$0xff]
        %v238 = vld [vmem:[%s206 + $0xf8] sm:$0xff]
        %v239 = vld [vmem:[%s206 + $0x100] sm:$0xff]
        %v240 = vld [vmem:[%s206 + $0x108] sm:$0xff]
        %v241 = vld [vmem:[%s206 + $0x110] sm:$0xff]
        %v242 = vld [vmem:[%s206 + $0x118] sm:$0xff]
        %v243 = vld [vmem:[%s1] sm:$0xff]
        %v244 = vld [vmem:[%s1 + $0x8] sm:$0xff]
        %v245 = vld [vmem:[%s1 + $0x10] sm:$0xff]
        %v246 = vld [vmem:[%s1 + $0x18] sm:$0xff]
        %v247 = vld [vmem:[%s1 + $0x20] sm:$0xff]
        %v248 = vld [vmem:[%s1 + $0x28] sm:$0xff]
        %v249 = vld [vmem:[%s1 + $0x30] sm:$0xff]
        %v250 = vld [vmem:[%s1 + $0x38] sm:$0xff]
        %v251 = vld [vmem:[%s1 + $0x40] sm:$0xff]
        %v252 = vld [vmem:[%s1 + $0x48] sm:$0xff]
        %v253 = vld [vmem:[%s1 + $0x50] sm:$0xff]
        %v254 = vld [vmem:[%s1 + $0x58] sm:$0xff]
        %v255 = vld [vmem:[%s1 + $0x60] sm:$0xff]
        %v256 = vld [vmem:[%s1 + $0x68] sm:$0xff]
        %v257 = vld [vmem:[%s1 + $0x70] sm:$0xff]
        %v258 = vld [vmem:[%s1 + $0x78] sm:$0xff]
        %vm259 = vcmask 392192
        %v261 = vsel %vm259, %v243, 0
        %v264 = vsel %vm259, %v244, 0
        %v267 = vsel %vm259, %v245, 0
        %v270 = vsel %vm259, %v246, 0
        %v273 = vsel %vm259, %v247, 0
        %v276 = vsel %vm259, %v248, 0
        %v279 = vsel %vm259, %v249, 0
        %v282 = vsel %vm259, %v250, 0
        %v285 = vsel %vm259, %v251, 0
        %v288 = vsel %vm259, %v252, 0
        %v291 = vsel %vm259, %v253, 0
        %v294 = vsel %vm259, %v254, 0
        %v297 = vsel %vm259, %v255, 0
        %v300 = vsel %vm259, %v256, 0
        %v303 = vsel %vm259, %v257, 0
        %v306 = vsel %vm259, %v258, 0
        %308 = vmatprep.subr.mxu0 %v208
        %309 = vmatpush1.msra.mxu0 %v207
        %310 = vmatprep.subr.mxu0 %v214
        %311 = vmatpush1.msra.mxu0 %v213
        %312 = vmatprep.subr.mxu0 %v220
        %313 = vmatpush1.msra.mxu0 %v219
        %314 = vmatprep.subr.mxu0 %v226
        %315 = vmatpush1.msra.mxu0 %v225
        %316 = vmatprep.subr.mxu0 %v232
        %317 = vmatpush1.msra.mxu0 %v231
        %318 = vmatprep.subr.mxu0 %v238
        %319 = vmatpush1.msra.mxu0 %v237
        %320 = vmatprep.subr.mxu0 0.0
        %321 = vmatpush1.msra.mxu0 0.0
        %322 = vmatprep.subr.mxu0 0.0
        %323 = vmatpush1.msra.mxu0 0.0
        %324 = vmatprep.subr.mxu0 0.0
        %325 = vmatpush1.msra.mxu0 0.0
        %326 = vmatprep.subr.mxu0 0.0
        %327 = vmatpush1.msra.mxu0 0.0
        %328 = vmatprep.subr.mxu0 0.0
        %329 = vmatpush1.msra.mxu0 0.0
        %330 = vmatprep.subr.mxu0 0.0
        %331 = vmatpush1.msra.mxu0 0.0
        %332 = vmatprep.subr.mxu0 0.0
        %333 = vmatpush1.msra.mxu0 0.0
        %334 = vmatprep.subr.mxu0 0.0
        %335 = vmatpush1.msra.mxu0 0.0
        %336 = vmatprep.subr.mxu0 0.0
        %337 = vmatpush1.msra.mxu0 0.0
        %338 = vmatprep.subr.mxu0 0.0
        %339 = vmatpush1.msra.mxu0 0.0
        %340 = vmatprep.subr.mxu0 0.0
        %341 = vmatpush1.msra.mxu0 0.0
        %342 = vmatprep.subr.mxu0 0.0
        %343 = vmatpush1.msra.mxu0 0.0
        %344 = vmatprep.subr.mxu0 0.0
        %345 = vmatpush1.msra.mxu0 0.0
        %346 = vmatprep.subr.mxu0 0.0
        %347 = vmatpush1.msra.mxu0 0.0
        %348 = vmatprep.subr.mxu0 0.0
        %349 = vmatpush1.msra.mxu0 0.0
        %350 = vmatprep.subr.mxu0 0.0
        %351 = vmatpush1.msra.mxu0 0.0
        %352 = vmatprep.subr.mxu0 0.0
        %353 = vmatpush1.msra.mxu0 0.0
        %354 = vmatprep.subr.mxu0 0.0
        %355 = vmatpush1.msra.mxu0 0.0
        %356 = vmatprep.subr.mxu0 0.0
        %357 = vmatpush1.msra.mxu0 0.0
        %358 = vmatprep.subr.mxu0 0.0
        %359 = vmatpush1.msra.mxu0 0.0
        %360 = vmatprep.subr.mxu0 0.0
        %361 = vmatpush1.msra.mxu0 0.0
        %362 = vmatprep.subr.mxu0 0.0
        %363 = vmatpush1.msra.mxu0 0.0
        %364 = vmatprep.subr.mxu0 0.0
        %365 = vmatpush1.msra.mxu0 0.0
        %366 = vmatprep.subr.mxu0 0.0
        %367 = vmatpush1.msra.mxu0 0.0
        %368 = vmatprep.subr.mxu0 0.0
        %369 = vmatpush1.msra.mxu0 0.0
        %370 = vmatprep.subr.mxu0 0.0
        %371 = vmatpush1.msra.mxu0 0.0
        %372 = vmatprep.mubr.f32.mxu0 0.0
        %373 = vmatmul.mubr.f32.gmra.mrb[0].mxu0 %v261
        %v374 = vpop.f32.mrb[0].mxu0
        %v375 = vadd.f32 0.0, %v374
        %v376 = vpop.f32.mrb[0].mxu0
        %v377 = vadd.f32 0.0, %v376
        %378 = vmatprep.mubr.f32.mxu0 0.0
        %379 = vmatmul.mubr.f32.gmra.mrb[0].mxu0 %v264
        %v380 = vpop.f32.mrb[0].mxu0
        %v381 = vadd.f32 0.0, %v380
        %v382 = vpop.f32.mrb[0].mxu0
        %v383 = vadd.f32 0.0, %v382
        %384 = vmatprep.mubr.f32.mxu0 0.0
        %385 = vmatmul.mubr.f32.gmra.mrb[0].mxu0 %v267
        %v386 = vpop.f32.mrb[0].mxu0
        %v387 = vadd.f32 0.0, %v386
        %v388 = vpop.f32.mrb[0].mxu0
        %v389 = vadd.f32 0.0, %v388
        %390 = vmatprep.mubr.f32.mxu0 0.0
        %391 = vmatmul.mubr.f32.gmra.mrb[0].mxu0 %v270
        %v392 = vpop.f32.mrb[0].mxu0
        %v393 = vadd.f32 0.0, %v392
        %v394 = vpop.f32.mrb[0].mxu0
        %v395 = vadd.f32 0.0, %v394
        %396 = vmatprep.mubr.f32.mxu0 0.0
        %397 = vmatmul.mubr.f32.gmra.mrb[0].mxu0 %v273
        %v398 = vpop.f32.mrb[0].mxu0
        %v399 = vadd.f32 0.0, %v398
        %v400 = vpop.f32.mrb[0].mxu0
        %v401 = vadd.f32 0.0, %v400
        %402 = vmatprep.mubr.f32.mxu0 0.0
        %403 = vmatmul.mubr.f32.gmra.mrb[0].mxu0 %v276
        %v404 = vpop.f32.mrb[0].mxu0
        %v405 = vadd.f32 0.0, %v404
        %v406 = vpop.f32.mrb[0].mxu0
        %v407 = vadd.f32 0.0, %v406
        %408 = vmatprep.mubr.f32.mxu0 0.0
        %409 = vmatmul.mubr.f32.gmra.mrb[0].mxu0 %v279
        %v410 = vpop.f32.mrb[0].mxu0
        %v411 = vadd.f32 0.0, %v410
        %v412 = vpop.f32.mrb[0].mxu0
        %v413 = vadd.f32 0.0, %v412
        %414 = vmatprep.mubr.f32.mxu0 0.0
        %415 = vmatmul.mubr.f32.gmra.mrb[0].mxu0 %v282
        %v416 = vpop.f32.mrb[0].mxu0
        %v417 = vadd.f32 0.0, %v416
        %v418 = vpop.f32.mrb[0].mxu0
        %v419 = vadd.f32 0.0, %v418
        %420 = vmatprep.mubr.f32.mxu0 0.0
        %421 = vmatmul.mubr.f32.gmra.mrb[0].mxu0 %v285
        %v422 = vpop.f32.mrb[0].mxu0
        %v423 = vadd.f32 0.0, %v422
        %v424 = vpop.f32.mrb[0].mxu0
        %v425 = vadd.f32 0.0, %v424
        %426 = vmatprep.mubr.f32.mxu0 0.0
        %427 = vmatmul.mubr.f32.gmra.mrb[0].mxu0 %v288
        %v428 = vpop.f32.mrb[0].mxu0
        %v429 = vadd.f32 0.0, %v428
        %v430 = vpop.f32.mrb[0].mxu0
        %v431 = vadd.f32 0.0, %v430
        %432 = vmatprep.mubr.f32.mxu0 0.0
        %433 = vmatmul.mubr.f32.gmra.mrb[0].mxu0 %v291
        %v434 = vpop.f32.mrb[0].mxu0
        %v435 = vadd.f32 0.0, %v434
        %v436 = vpop.f32.mrb[0].mxu0
        %v437 = vadd.f32 0.0, %v436
        %438 = vmatprep.mubr.f32.mxu0 0.0
        %439 = vmatmul.mubr.f32.gmra.mrb[0].mxu0 %v294
        %v440 = vpop.f32.mrb[0].mxu0
        %v441 = vadd.f32 0.0, %v440
        %v442 = vpop.f32.mrb[0].mxu0
        %v443 = vadd.f32 0.0, %v442
        %444 = vmatprep.mubr.f32.mxu0 0.0
        %445 = vmatmul.mubr.f32.gmra.mrb[0].mxu0 %v297
        %v446 = vpop.f32.mrb[0].mxu0
        %v447 = vadd.f32 0.0, %v446
        %v448 = vpop.f32.mrb[0].mxu0
        %v449 = vadd.f32 0.0, %v448
        %450 = vmatprep.mubr.f32.mxu0 0.0
        %451 = vmatmul.mubr.f32.gmra.mrb[0].mxu0 %v300
        %v452 = vpop.f32.mrb[0].mxu0
        %v453 = vadd.f32 0.0, %v452
        %v454 = vpop.f32.mrb[0].mxu0
        %v455 = vadd.f32 0.0, %v454
        %456 = vmatprep.mubr.f32.mxu0 0.0
        %457 = vmatmul.mubr.f32.gmra.mrb[0].mxu0 %v303
        %v458 = vpop.f32.mrb[0].mxu0
        %v459 = vadd.f32 0.0, %v458
        %v460 = vpop.f32.mrb[0].mxu0
        %v461 = vadd.f32 0.0, %v460
        %462 = vmatprep.mubr.f32.mxu0 0.0
        %463 = vmatmul.mubr.f32.gmra.mrb[0].mxu0 %v306
        %v464 = vpop.f32.mrb[0].mxu0
        %v465 = vadd.f32 0.0, %v464
        %v466 = vpop.f32.mrb[0].mxu0
        %v467 = vadd.f32 0.0, %v466
        %468 = vdwg.mxu0
        %469 = vmatprep.subr.mxu0 %v210
        %470 = vmatpush1.msra.mxu0 %v209
        %471 = vmatprep.subr.mxu0 %v216
        %472 = vmatpush1.msra.mxu0 %v215
        %473 = vmatprep.subr.mxu0 %v222
        %474 = vmatpush1.msra.mxu0 %v221
        %475 = vmatprep.subr.mxu0 %v228
        %476 = vmatpush1.msra.mxu0 %v227
        %477 = vmatprep.subr.mxu0 %v234
        %478 = vmatpush1.msra.mxu0 %v233
        %479 = vmatprep.subr.mxu0 %v240
        %480 = vmatpush1.msra.mxu0 %v239
        %481 = vmatprep.subr.mxu0 0.0
        %482 = vmatpush1.msra.mxu0 0.0
        %483 = vmatprep.subr.mxu0 0.0
        %484 = vmatpush1.msra.mxu0 0.0
        %485 = vmatprep.subr.mxu0 0.0
        %486 = vmatpush1.msra.mxu0 0.0
        %487 = vmatprep.subr.mxu0 0.0
        %488 = vmatpush1.msra.mxu0 0.0
        %489 = vmatprep.subr.mxu0 0.0
        %490 = vmatpush1.msra.mxu0 0.0
        %491 = vmatprep.subr.mxu0 0.0
        %492 = vmatpush1.msra.mxu0 0.0
        %493 = vmatprep.subr.mxu0 0.0
        %494 = vmatpush1.msra.mxu0 0.0
        %495 = vmatprep.subr.mxu0 0.0
        %496 = vmatpush1.msra.mxu0 0.0
        %497 = vmatprep.subr.mxu0 0.0
        %498 = vmatpush1.msra.mxu0 0.0
        %499 = vmatprep.subr.mxu0 0.0
        %500 = vmatpush1.msra.mxu0 0.0
        %501 = vmatprep.subr.mxu0 0.0
        %502 = vmatpush1.msra.mxu0 0.0
        %503 = vmatprep.subr.mxu0 0.0
        %504 = vmatpush1.msra.mxu0 0.0
        %505 = vmatprep.subr.mxu0 0.0
        %506 = vmatpush1.msra.mxu0 0.0
        %507 = vmatprep.subr.mxu0 0.0
        %508 = vmatpush1.msra.mxu0 0.0
        %509 = vmatprep.subr.mxu0 0.0
        %510 = vmatpush1.msra.mxu0 0.0
        %511 = vmatprep.subr.mxu0 0.0
        %512 = vmatpush1.msra.mxu0 0.0
        %513 = vmatprep.subr.mxu0 0.0
        %514 = vmatpush1.msra.mxu0 0.0
        %515 = vmatprep.subr.mxu0 0.0
        %516 = vmatpush1.msra.mxu0 0.0
        %517 = vmatprep.subr.mxu0 0.0
        %518 = vmatpush1.msra.mxu0 0.0
        %519 = vmatprep.subr.mxu0 0.0
        %520 = vmatpush1.msra.mxu0 0.0
        %521 = vmatprep.subr.mxu0 0.0
        %522 = vmatpush1.msra.mxu0 0.0
        %523 = vmatprep.subr.mxu0 0.0
        %524 = vmatpush1.msra.mxu0 0.0
        %525 = vmatprep.subr.mxu0 0.0
        %526 = vmatpush1.msra.mxu0 0.0
        %527 = vmatprep.subr.mxu0 0.0
        %528 = vmatpush1.msra.mxu0 0.0
        %529 = vmatprep.subr.mxu0 0.0
        %530 = vmatpush1.msra.mxu0 0.0
        %531 = vmatprep.subr.mxu0 0.0
        %532 = vmatpush1.msra.mxu0 0.0
        %533 = vmatprep.mubr.f32.mxu0 0.0
        %534 = vmatmul.mubr.f32.gmra.mrb[0].mxu0 %v261
        %v535 = vpop.f32.mrb[0].mxu0
        %v536 = vadd.f32 0.0, %v535
        %v537 = vpop.f32.mrb[0].mxu0
        %v538 = vadd.f32 0.0, %v537
        %539 = vmatprep.mubr.f32.mxu0 0.0
        %540 = vmatmul.mubr.f32.gmra.mrb[0].mxu0 %v264
        %v541 = vpop.f32.mrb[0].mxu0
        %v542 = vadd.f32 0.0, %v541
        %v543 = vpop.f32.mrb[0].mxu0
        %v544 = vadd.f32 0.0, %v543
        %545 = vmatprep.mubr.f32.mxu0 0.0
        %546 = vmatmul.mubr.f32.gmra.mrb[0].mxu0 %v267
        %v547 = vpop.f32.mrb[0].mxu0
        %v548 = vadd.f32 0.0, %v547
        %v549 = vpop.f32.mrb[0].mxu0
        %v550 = vadd.f32 0.0, %v549
        %551 = vmatprep.mubr.f32.mxu0 0.0
        %552 = vmatmul.mubr.f32.gmra.mrb[0].mxu0 %v270
        %v553 = vpop.f32.mrb[0].mxu0
        %v554 = vadd.f32 0.0, %v553
        %v555 = vpop.f32.mrb[0].mxu0
        %v556 = vadd.f32 0.0, %v555
        %557 = vmatprep.mubr.f32.mxu0 0.0
        %558 = vmatmul.mubr.f32.gmra.mrb[0].mxu0 %v273
        %v559 = vpop.f32.mrb[0].mxu0
        %v560 = vadd.f32 0.0, %v559
        %v561 = vpop.f32.mrb[0].mxu0
        %v562 = vadd.f32 0.0, %v561
        %563 = vmatprep.mubr.f32.mxu0 0.0
        %564 = vmatmul.mubr.f32.gmra.mrb[0].mxu0 %v276
        %v565 = vpop.f32.mrb[0].mxu0
        %v566 = vadd.f32 0.0, %v565
        %v567 = vpop.f32.mrb[0].mxu0
        %v568 = vadd.f32 0.0, %v567
        %569 = vmatprep.mubr.f32.mxu0 0.0
        %570 = vmatmul.mubr.f32.gmra.mrb[0].mxu0 %v279
        %v571 = vpop.f32.mrb[0].mxu0
        %v572 = vadd.f32 0.0, %v571
        %v573 = vpop.f32.mrb[0].mxu0
        %v574 = vadd.f32 0.0, %v573
        %575 = vmatprep.mubr.f32.mxu0 0.0
        %576 = vmatmul.mubr.f32.gmra.mrb[0].mxu0 %v282
        %v577 = vpop.f32.mrb[0].mxu0
        %v578 = vadd.f32 0.0, %v577
        %v579 = vpop.f32.mrb[0].mxu0
        %v580 = vadd.f32 0.0, %v579
        %581 = vmatprep.mubr.f32.mxu0 0.0
        %582 = vmatmul.mubr.f32.gmra.mrb[0].mxu0 %v285
        %v583 = vpop.f32.mrb[0].mxu0
        %v584 = vadd.f32 0.0, %v583
        %v585 = vpop.f32.mrb[0].mxu0
        %v586 = vadd.f32 0.0, %v585
        %587 = vmatprep.mubr.f32.mxu0 0.0
        %588 = vmatmul.mubr.f32.gmra.mrb[0].mxu0 %v288
        %v589 = vpop.f32.mrb[0].mxu0
        %v590 = vadd.f32 0.0, %v589
        %v591 = vpop.f32.mrb[0].mxu0
        %v592 = vadd.f32 0.0, %v591
        %593 = vmatprep.mubr.f32.mxu0 0.0
        %594 = vmatmul.mubr.f32.gmra.mrb[0].mxu0 %v291
        %v595 = vpop.f32.mrb[0].mxu0
        %v596 = vadd.f32 0.0, %v595
        %v597 = vpop.f32.mrb[0].mxu0
        %v598 = vadd.f32 0.0, %v597
        %599 = vmatprep.mubr.f32.mxu0 0.0
        %600 = vmatmul.mubr.f32.gmra.mrb[0].mxu0 %v294
        %v601 = vpop.f32.mrb[0].mxu0
        %v602 = vadd.f32 0.0, %v601
        %v603 = vpop.f32.mrb[0].mxu0
        %v604 = vadd.f32 0.0, %v603
        %605 = vmatprep.mubr.f32.mxu0 0.0
        %606 = vmatmul.mubr.f32.gmra.mrb[0].mxu0 %v297
        %v607 = vpop.f32.mrb[0].mxu0
        %v608 = vadd.f32 0.0, %v607
        %v609 = vpop.f32.mrb[0].mxu0
        %v610 = vadd.f32 0.0, %v609
        %611 = vmatprep.mubr.f32.mxu0 0.0
        %612 = vmatmul.mubr.f32.gmra.mrb[0].mxu0 %v300
        %v613 = vpop.f32.mrb[0].mxu0
        %v614 = vadd.f32 0.0, %v613
        %v615 = vpop.f32.mrb[0].mxu0
        %v616 = vadd.f32 0.0, %v615
        %617 = vmatprep.mubr.f32.mxu0 0.0
        %618 = vmatmul.mubr.f32.gmra.mrb[0].mxu0 %v303
        %v619 = vpop.f32.mrb[0].mxu0
        %v620 = vadd.f32 0.0, %v619
        %v621 = vpop.f32.mrb[0].mxu0
        %v622 = vadd.f32 0.0, %v621
        %623 = vmatprep.mubr.f32.mxu0 0.0
        %624 = vmatmul.mubr.f32.gmra.mrb[0].mxu0 %v306
        %v625 = vpop.f32.mrb[0].mxu0
        %v626 = vadd.f32 0.0, %v625
        %v627 = vpop.f32.mrb[0].mxu0
        %v628 = vadd.f32 0.0, %v627
        %629 = vdwg.mxu0
        %630 = vmatprep.subr.mxu0 %v212
        %631 = vmatpush1.msra.mxu0 %v211
        %632 = vmatprep.subr.mxu0 %v218
        %633 = vmatpush1.msra.mxu0 %v217
        %634 = vmatprep.subr.mxu0 %v224
        %635 = vmatpush1.msra.mxu0 %v223
        %636 = vmatprep.subr.mxu0 %v230
        %637 = vmatpush1.msra.mxu0 %v229
        %638 = vmatprep.subr.mxu0 %v236
        %639 = vmatpush1.msra.mxu0 %v235
        %640 = vmatprep.subr.mxu0 %v242
        %641 = vmatpush1.msra.mxu0 %v241
        %642 = vmatprep.subr.mxu0 0.0
        %643 = vmatpush1.msra.mxu0 0.0
        %644 = vmatprep.subr.mxu0 0.0
        %645 = vmatpush1.msra.mxu0 0.0
        %646 = vmatprep.subr.mxu0 0.0
        %647 = vmatpush1.msra.mxu0 0.0
        %648 = vmatprep.subr.mxu0 0.0
        %649 = vmatpush1.msra.mxu0 0.0
        %650 = vmatprep.subr.mxu0 0.0
        %651 = vmatpush1.msra.mxu0 0.0
        %652 = vmatprep.subr.mxu0 0.0
        %653 = vmatpush1.msra.mxu0 0.0
        %654 = vmatprep.subr.mxu0 0.0
        %655 = vmatpush1.msra.mxu0 0.0
        %656 = vmatprep.subr.mxu0 0.0
        %657 = vmatpush1.msra.mxu0 0.0
        %658 = vmatprep.subr.mxu0 0.0
        %659 = vmatpush1.msra.mxu0 0.0
        %660 = vmatprep.subr.mxu0 0.0
        %661 = vmatpush1.msra.mxu0 0.0
        %662 = vmatprep.subr.mxu0 0.0
        %663 = vmatpush1.msra.mxu0 0.0
        %664 = vmatprep.subr.mxu0 0.0
        %665 = vmatpush1.msra.mxu0 0.0
        %666 = vmatprep.subr.mxu0 0.0
        %667 = vmatpush1.msra.mxu0 0.0
        %668 = vmatprep.subr.mxu0 0.0
        %669 = vmatpush1.msra.mxu0 0.0
        %670 = vmatprep.subr.mxu0 0.0
        %671 = vmatpush1.msra.mxu0 0.0
        %672 = vmatprep.subr.mxu0 0.0
        %673 = vmatpush1.msra.mxu0 0.0
        %674 = vmatprep.subr.mxu0 0.0
        %675 = vmatpush1.msra.mxu0 0.0
        %676 = vmatprep.subr.mxu0 0.0
        %677 = vmatpush1.msra.mxu0 0.0
        %678 = vmatprep.subr.mxu0 0.0
        %679 = vmatpush1.msra.mxu0 0.0
        %680 = vmatprep.subr.mxu0 0.0
        %681 = vmatpush1.msra.mxu0 0.0
        %682 = vmatprep.subr.mxu0 0.0
        %683 = vmatpush1.msra.mxu0 0.0
        %684 = vmatprep.subr.mxu0 0.0
        %685 = vmatpush1.msra.mxu0 0.0
        %686 = vmatprep.subr.mxu0 0.0
        %687 = vmatpush1.msra.mxu0 0.0
        %688 = vmatprep.subr.mxu0 0.0
        %689 = vmatpush1.msra.mxu0 0.0
        %690 = vmatprep.subr.mxu0 0.0
        %691 = vmatpush1.msra.mxu0 0.0
        %692 = vmatprep.subr.mxu0 0.0
        %693 = vmatpush1.msra.mxu0 0.0
        %694 = vmatprep.mubr.f32.mxu0 0.0
        %695 = vmatmul.mubr.f32.gmra.mrb[0].mxu0 %v261
        %v696 = vpop.f32.mrb[0].mxu0
        %v697 = vadd.f32 0.0, %v696
        %v698 = vpop.f32.mrb[0].mxu0
        %v699 = vadd.f32 0.0, %v698
        %700 = vmatprep.mubr.f32.mxu0 0.0
        %701 = vmatmul.mubr.f32.gmra.mrb[0].mxu0 %v264
        %v702 = vpop.f32.mrb[0].mxu0
        %v703 = vadd.f32 0.0, %v702
        %v704 = vpop.f32.mrb[0].mxu0
        %v705 = vadd.f32 0.0, %v704
        %706 = vmatprep.mubr.f32.mxu0 0.0
        %707 = vmatmul.mubr.f32.gmra.mrb[0].mxu0 %v267
        %v708 = vpop.f32.mrb[0].mxu0
        %v709 = vadd.f32 0.0, %v708
        %v710 = vpop.f32.mrb[0].mxu0
        %v711 = vadd.f32 0.0, %v710
        %712 = vmatprep.mubr.f32.mxu0 0.0
        %713 = vmatmul.mubr.f32.gmra.mrb[0].mxu0 %v270
        %v714 = vpop.f32.mrb[0].mxu0
        %v715 = vadd.f32 0.0, %v714
        %v716 = vpop.f32.mrb[0].mxu0
        %v717 = vadd.f32 0.0, %v716
        %718 = vmatprep.mubr.f32.mxu0 0.0
        %719 = vmatmul.mubr.f32.gmra.mrb[0].mxu0 %v273
        %v720 = vpop.f32.mrb[0].mxu0
        %v721 = vadd.f32 0.0, %v720
        %v722 = vpop.f32.mrb[0].mxu0
        %v723 = vadd.f32 0.0, %v722
        %724 = vmatprep.mubr.f32.mxu0 0.0
        %725 = vmatmul.mubr.f32.gmra.mrb[0].mxu0 %v276
        %v726 = vpop.f32.mrb[0].mxu0
        %v727 = vadd.f32 0.0, %v726
        %v728 = vpop.f32.mrb[0].mxu0
        %v729 = vadd.f32 0.0, %v728
        %730 = vmatprep.mubr.f32.mxu0 0.0
        %731 = vmatmul.mubr.f32.gmra.mrb[0].mxu0 %v279
        %v732 = vpop.f32.mrb[0].mxu0
        %v733 = vadd.f32 0.0, %v732
        %v734 = vpop.f32.mrb[0].mxu0
        %v735 = vadd.f32 0.0, %v734
        %736 = vmatprep.mubr.f32.mxu0 0.0
        %737 = vmatmul.mubr.f32.gmra.mrb[0].mxu0 %v282
        %v738 = vpop.f32.mrb[0].mxu0
        %v739 = vadd.f32 0.0, %v738
        %v740 = vpop.f32.mrb[0].mxu0
        %v741 = vadd.f32 0.0, %v740
        %742 = vmatprep.mubr.f32.mxu0 0.0
        %743 = vmatmul.mubr.f32.gmra.mrb[0].mxu0 %v285
        %v744 = vpop.f32.mrb[0].mxu0
        %v745 = vadd.f32 0.0, %v744
        %v746 = vpop.f32.mrb[0].mxu0
        %v747 = vadd.f32 0.0, %v746
        %748 = vmatprep.mubr.f32.mxu0 0.0
        %749 = vmatmul.mubr.f32.gmra.mrb[0].mxu0 %v288
        %v750 = vpop.f32.mrb[0].mxu0
        %v751 = vadd.f32 0.0, %v750
        %v752 = vpop.f32.mrb[0].mxu0
        %v753 = vadd.f32 0.0, %v752
        %754 = vmatprep.mubr.f32.mxu0 0.0
        %755 = vmatmul.mubr.f32.gmra.mrb[0].mxu0 %v291
        %v756 = vpop.f32.mrb[0].mxu0
        %v757 = vadd.f32 0.0, %v756
        %v758 = vpop.f32.mrb[0].mxu0
        %v759 = vadd.f32 0.0, %v758
        %760 = vmatprep.mubr.f32.mxu0 0.0
        %761 = vmatmul.mubr.f32.gmra.mrb[0].mxu0 %v294
        %v762 = vpop.f32.mrb[0].mxu0
        %v763 = vadd.f32 0.0, %v762
        %v764 = vpop.f32.mrb[0].mxu0
        %v765 = vadd.f32 0.0, %v764
        %766 = vmatprep.mubr.f32.mxu0 0.0
        %767 = vmatmul.mubr.f32.gmra.mrb[0].mxu0 %v297
        %v768 = vpop.f32.mrb[0].mxu0
        %v769 = vadd.f32 0.0, %v768
        %v770 = vpop.f32.mrb[0].mxu0
        %v771 = vadd.f32 0.0, %v770
        %772 = vmatprep.mubr.f32.mxu0 0.0
        %773 = vmatmul.mubr.f32.gmra.mrb[0].mxu0 %v300
        %v774 = vpop.f32.mrb[0].mxu0
        %v775 = vadd.f32 0.0, %v774
        %v776 = vpop.f32.mrb[0].mxu0
        %v777 = vadd.f32 0.0, %v776
        %778 = vmatprep.mubr.f32.mxu0 0.0
        %779 = vmatmul.mubr.f32.gmra.mrb[0].mxu0 %v303
        %v780 = vpop.f32.mrb[0].mxu0
        %v781 = vadd.f32 0.0, %v780
        %v782 = vpop.f32.mrb[0].mxu0
        %v783 = vadd.f32 0.0, %v782
        %784 = vmatprep.mubr.f32.mxu0 0.0
        %785 = vmatmul.mubr.f32.gmra.mrb[0].mxu0 %v306
        %v786 = vpop.f32.mrb[0].mxu0
        %v787 = vadd.f32 0.0, %v786
        %v788 = vpop.f32.mrb[0].mxu0
        %v789 = vadd.f32 0.0, %v788
        %790 = vdwg.mxu0
        %s791 = smul.u32 %s22, 4
        %s792 = sld [smem:[#allocation4 + %s791]]
        %v793 = vmul.f32 %v375, 0.054488685
        %v794 = vmul.f32 %v377, 0.054488685
        %v795 = vmul.f32 %v536, 0.054488685
        %v796 = vmul.f32 %v538, 0.054488685
        %v797 = vmul.f32 %v697, 0.054488685
        %v798 = vmul.f32 %v381, 0.054488685
        %v799 = vmul.f32 %v383, 0.054488685
        %v800 = vmul.f32 %v542, 0.054488685
        %v801 = vmul.f32 %v544, 0.054488685
        %v802 = vmul.f32 %v703, 0.054488685
        %v803 = vmul.f32 %v387, 0.054488685
        %v804 = vmul.f32 %v389, 0.054488685
        %v805 = vmul.f32 %v548, 0.054488685
        %v806 = vmul.f32 %v550, 0.054488685
        %v807 = vmul.f32 %v709, 0.054488685
        %v808 = vmul.f32 %v393, 0.054488685
        %v809 = vmul.f32 %v395, 0.054488685
        %v810 = vmul.f32 %v554, 0.054488685
        %v811 = vmul.f32 %v556, 0.054488685
        %v812 = vmul.f32 %v715, 0.054488685
        %v813 = vmul.f32 %v375, 0.24420135
        %v814 = vmul.f32 %v377, 0.24420135
        %v815 = vmul.f32 %v536, 0.24420135
        %v816 = vmul.f32 %v538, 0.24420135
        %v817 = vmul.f32 %v697, 0.24420135
        %v818 = vmul.f32 %v381, 0.24420135
        %v819 = vmul.f32 %v383, 0.24420135
        %v820 = vmul.f32 %v542, 0.24420135
        %v821 = vmul.f32 %v544, 0.24420135
        %v822 = vmul.f32 %v703, 0.24420135
        %v823 = vmul.f32 %v387, 0.24420135
        %v824 = vmul.f32 %v389, 0.24420135
        %v825 = vmul.f32 %v548, 0.24420135
        %v826 = vmul.f32 %v550, 0.24420135
        %v827 = vmul.f32 %v709, 0.24420135
        %v828 = vmul.f32 %v393, 0.24420135
        %v829 = vmul.f32 %v395, 0.24420135
        %v830 = vmul.f32 %v554, 0.24420135
        %v831 = vmul.f32 %v556, 0.24420135
        %v832 = vmul.f32 %v715, 0.24420135
        %853 = vrot.lane.b32.xlu0 %v813, 112
        %v854 = vpop.permute.xlu0 %853
        %855 = vrot.lane.b32.xlu0 %v814, 112
        %v856 = vpop.permute.xlu0 %855
        %857 = vrot.lane.b32.xlu0 %v815, 112
        %v858 = vpop.permute.xlu0 %857
        %859 = vrot.lane.b32.xlu0 %v816, 112
        %v860 = vpop.permute.xlu0 %859
        %861 = vrot.lane.b32.xlu0 %v817, 112
        %v862 = vpop.permute.xlu0 %861
        %863 = vrot.lane.b32.xlu0 %v818, 112
        %v864 = vpop.permute.xlu0 %863
        %865 = vrot.lane.b32.xlu0 %v819, 112
        %v866 = vpop.permute.xlu0 %865
        %867 = vrot.lane.b32.xlu0 %v820, 112
        %v868 = vpop.permute.xlu0 %867
        %869 = vrot.lane.b32.xlu0 %v821, 112
        %v870 = vpop.permute.xlu0 %869
        %871 = vrot.lane.b32.xlu0 %v822, 112
        %v872 = vpop.permute.xlu0 %871
        %873 = vrot.lane.b32.xlu0 %v823, 112
        %v874 = vpop.permute.xlu0 %873
        %875 = vrot.lane.b32.xlu0 %v824, 112
        %v876 = vpop.permute.xlu0 %875
        %877 = vrot.lane.b32.xlu0 %v825, 112
        %v878 = vpop.permute.xlu0 %877
        %879 = vrot.lane.b32.xlu0 %v826, 112
        %v880 = vpop.permute.xlu0 %879
        %881 = vrot.lane.b32.xlu0 %v827, 112
        %v882 = vpop.permute.xlu0 %881
        %883 = vrot.lane.b32.xlu0 %v828, 112
        %v884 = vpop.permute.xlu0 %883
        %885 = vrot.lane.b32.xlu0 %v829, 112
        %v886 = vpop.permute.xlu0 %885
        %887 = vrot.lane.b32.xlu0 %v830, 112
        %v888 = vpop.permute.xlu0 %887
        %889 = vrot.lane.b32.xlu0 %v831, 112
        %v890 = vpop.permute.xlu0 %889
        %891 = vrot.lane.b32.xlu0 %v832, 112
        %v892 = vpop.permute.xlu0 %891
        %vm893 = vcmask 916480
        %v894 = vsel %vm893, %v854, %v856
        %v895 = vsel %vm893, %v856, %v858
        %v896 = vsel %vm893, %v858, %v860
        %v897 = vsel %vm893, %v860, %v862
        %v898 = vsel %vm893, %v864, %v866
        %v899 = vsel %vm893, %v866, %v868
        %v900 = vsel %vm893, %v868, %v870
        %v901 = vsel %vm893, %v870, %v872
        %v902 = vsel %vm893, %v874, %v876
        %v903 = vsel %vm893, %v876, %v878
        %v904 = vsel %vm893, %v878, %v880
        %v905 = vsel %vm893, %v880, %v882
        %v906 = vsel %vm893, %v884, %v886
        %v907 = vsel %vm893, %v886, %v888
        %v908 = vsel %vm893, %v888, %v890
        %v909 = vsel %vm893, %v890, %v892
        %v930 = vadd.f32 %v793, %v894
        %v931 = vadd.f32 %v794, %v895
        %v932 = vadd.f32 %v795, %v896
        %v933 = vadd.f32 %v796, %v897
        %v934 = vadd.f32 %v797, %v862
        %v935 = vadd.f32 %v798, %v898
        %v936 = vadd.f32 %v799, %v899
        %v937 = vadd.f32 %v800, %v900
        %v938 = vadd.f32 %v801, %v901
        %v939 = vadd.f32 %v802, %v872
        %v940 = vadd.f32 %v803, %v902
        %v941 = vadd.f32 %v804, %v903
        %v942 = vadd.f32 %v805, %v904
        %v943 = vadd.f32 %v806, %v905
        %v944 = vadd.f32 %v807, %v882
        %v945 = vadd.f32 %v808, %v906
        %v946 = vadd.f32 %v809, %v907
        %v947 = vadd.f32 %v810, %v908
        %v948 = vadd.f32 %v811, %v909
        %v949 = vadd.f32 %v812, %v892
        %v950 = vmul.f32 %v377, 0.40261996
        %v951 = vmul.f32 %v536, 0.40261996
        %v952 = vmul.f32 %v538, 0.40261996
        %v953 = vmul.f32 %v697, 0.40261996
        %v954 = vmul.f32 %v383, 0.40261996
        %v955 = vmul.f32 %v542, 0.40261996
        %v956 = vmul.f32 %v544, 0.40261996
        %v957 = vmul.f32 %v703, 0.40261996
        %v958 = vmul.f32 %v389, 0.40261996
        %v959 = vmul.f32 %v548, 0.40261996
        %v960 = vmul.f32 %v550, 0.40261996
        %v961 = vmul.f32 %v709, 0.40261996
        %v962 = vmul.f32 %v395, 0.40261996
        %v963 = vmul.f32 %v554, 0.40261996
        %v964 = vmul.f32 %v556, 0.40261996
        %v965 = vmul.f32 %v715, 0.40261996
        %982 = vrot.lane.b32.xlu0 %v950, 96
        %v983 = vpop.permute.xlu0 %982
        %984 = vrot.lane.b32.xlu0 %v951, 96
        %v985 = vpop.permute.xlu0 %984
        %986 = vrot.lane.b32.xlu0 %v952, 96
        %v987 = vpop.permute.xlu0 %986
        %988 = vrot.lane.b32.xlu0 %v953, 96
        %v989 = vpop.permute.xlu0 %988
        %990 = vrot.lane.b32.xlu0 %v954, 96
        %v991 = vpop.permute.xlu0 %990
        %992 = vrot.lane.b32.xlu0 %v955, 96
        %v993 = vpop.permute.xlu0 %992
        %994 = vrot.lane.b32.xlu0 %v956, 96
        %v995 = vpop.permute.xlu0 %994
        %996 = vrot.lane.b32.xlu0 %v957, 96
        %v997 = vpop.permute.xlu0 %996
        %998 = vrot.lane.b32.xlu0 %v958, 96
        %v999 = vpop.permute.xlu0 %998
        %1000 = vrot.lane.b32.xlu0 %v959, 96
        %v1001 = vpop.permute.xlu0 %1000
        %1002 = vrot.lane.b32.xlu0 %v960, 96
        %v1003 = vpop.permute.xlu0 %1002
        %1004 = vrot.lane.b32.xlu0 %v961, 96
        %v1005 = vpop.permute.xlu0 %1004
        %1006 = vrot.lane.b32.xlu0 %v962, 96
        %v1007 = vpop.permute.xlu0 %1006
        %1008 = vrot.lane.b32.xlu0 %v963, 96
        %v1009 = vpop.permute.xlu0 %1008
        %1010 = vrot.lane.b32.xlu0 %v964, 96
        %v1011 = vpop.permute.xlu0 %1010
        %1012 = vrot.lane.b32.xlu0 %v965, 96
        %v1013 = vpop.permute.xlu0 %1012
        %vm1014 = vcmask 785408
        %v1015 = vsel %vm1014, %v983, %v985
        %v1016 = vsel %vm1014, %v985, %v987
        %v1017 = vsel %vm1014, %v987, %v989
        %v1018 = vsel %vm1014, %v991, %v993
        %v1019 = vsel %vm1014, %v993, %v995
        %v1020 = vsel %vm1014, %v995, %v997
        %v1021 = vsel %vm1014, %v999, %v1001
        %v1022 = vsel %vm1014, %v1001, %v1003
        %v1023 = vsel %vm1014, %v1003, %v1005
        %v1024 = vsel %vm1014, %v1007, %v1009
        %v1025 = vsel %vm1014, %v1009, %v1011
        %v1026 = vsel %vm1014, %v1011, %v1013
        %v1047 = vadd.f32 %v930, %v983
        %v1048 = vadd.f32 %v931, %v1015
        %v1049 = vadd.f32 %v932, %v1016
        %v1050 = vadd.f32 %v933, %v1017
        %v1051 = vadd.f32 %v934, %v989
        %v1052 = vadd.f32 %v935, %v991
        %v1053 = vadd.f32 %v936, %v1018
        %v1054 = vadd.f32 %v937, %v1019
        %v1055 = vadd.f32 %v938, %v1020
        %v1056 = vadd.f32 %v939, %v997
        %v1057 = vadd.f32 %v940, %v999
        %v1058 = vadd.f32 %v941, %v1021
        %v1059 = vadd.f32 %v942, %v1022
        %v1060 = vadd.f32 %v943, %v1023
        %v1061 = vadd.f32 %v944, %v1005
        %v1062 = vadd.f32 %v945, %v1007
        %v1063 = vadd.f32 %v946, %v1024
        %v1064 = vadd.f32 %v947, %v1025
        %v1065 = vadd.f32 %v948, %v1026
        %v1066 = vadd.f32 %v949, %v1013
        %v1067 = vmul.f32 %v699, 0.24420135
        %v1068 = vmul.f32 %v705, 0.24420135
        %v1069 = vmul.f32 %v711, 0.24420135
        %v1070 = vmul.f32 %v717, 0.24420135
        %1075 = vrot.lane.b32.xlu0 %v814, 80
        %v1076 = vpop.permute.xlu0 %1075
        %1077 = vrot.lane.b32.xlu0 %v815, 80
        %v1078 = vpop.permute.xlu0 %1077
        %1079 = vrot.lane.b32.xlu0 %v816, 80
        %v1080 = vpop.permute.xlu0 %1079
        %1081 = vrot.lane.b32.xlu0 %v817, 80
        %v1082 = vpop.permute.xlu0 %1081
        %1083 = vrot.lane.b32.xlu0 %v1067, 80
        %v1084 = vpop.permute.xlu0 %1083
        %1085 = vrot.lane.b32.xlu0 %v819, 80
        %v1086 = vpop.permute.xlu0 %1085
        %1087 = vrot.lane.b32.xlu0 %v820, 80
        %v1088 = vpop.permute.xlu0 %1087
        %1089 = vrot.lane.b32.xlu0 %v821, 80
        %v1090 = vpop.permute.xlu0 %1089
        %1091 = vrot.lane.b32.xlu0 %v822, 80
        %v1092 = vpop.permute.xlu0 %1091
        %1093 = vrot.lane.b32.xlu0 %v1068, 80
        %v1094 = vpop.permute.xlu0 %1093
        %1095 = vrot.lane.b32.xlu0 %v824, 80
        %v1096 = vpop.permute.xlu0 %1095
        %1097 = vrot.lane.b32.xlu0 %v825, 80
        %v1098 = vpop.permute.xlu0 %1097
        %1099 = vrot.lane.b32.xlu0 %v826, 80
        %v1100 = vpop.permute.xlu0 %1099
        %1101 = vrot.lane.b32.xlu0 %v827, 80
        %v1102 = vpop.permute.xlu0 %1101
        %1103 = vrot.lane.b32.xlu0 %v1069, 80
        %v1104 = vpop.permute.xlu0 %1103
        %1105 = vrot.lane.b32.xlu0 %v829, 80
        %v1106 = vpop.permute.xlu0 %1105
        %1107 = vrot.lane.b32.xlu0 %v830, 80
        %v1108 = vpop.permute.xlu0 %1107
        %1109 = vrot.lane.b32.xlu0 %v831, 80
        %v1110 = vpop.permute.xlu0 %1109
        %1111 = vrot.lane.b32.xlu0 %v832, 80
        %v1112 = vpop.permute.xlu0 %1111
        %1113 = vrot.lane.b32.xlu0 %v1070, 80
        %v1114 = vpop.permute.xlu0 %1113
        %vm1115 = vcmask 654336
        %v1116 = vsel %vm1115, %v1076, %v1078
        %v1117 = vsel %vm1115, %v1078, %v1080
        %v1118 = vsel %vm1115, %v1080, %v1082
        %v1119 = vsel %vm1115, %v1082, %v1084
        %v1120 = vsel %vm1115, %v1086, %v1088
        %v1121 = vsel %vm1115, %v1088, %v1090
        %v1122 = vsel %vm1115, %v1090, %v1092
        %v1123 = vsel %vm1115, %v1092, %v1094
        %v1124 = vsel %vm1115, %v1096, %v1098
        %v1125 = vsel %vm1115, %v1098, %v1100
        %v1126 = vsel %vm1115, %v1100, %v1102
        %v1127 = vsel %vm1115, %v1102, %v1104
        %v1128 = vsel %vm1115, %v1106, %v1108
        %v1129 = vsel %vm1115, %v1108, %v1110
        %v1130 = vsel %vm1115, %v1110, %v1112
        %v1131 = vsel %vm1115, %v1112, %v1114
        %v1152 = vadd.f32 %v1047, %v1076
        %v1153 = vadd.f32 %v1048, %v1116
        %v1154 = vadd.f32 %v1049, %v1117
        %v1155 = vadd.f32 %v1050, %v1118
        %v1156 = vadd.f32 %v1051, %v1119
        %v1157 = vadd.f32 %v1052, %v1086
        %v1158 = vadd.f32 %v1053, %v1120
        %v1159 = vadd.f32 %v1054, %v1121
        %v1160 = vadd.f32 %v1055, %v1122
        %v1161 = vadd.f32 %v1056, %v1123
        %v1162 = vadd.f32 %v1057, %v1096
        %v1163 = vadd.f32 %v1058, %v1124
        %v1164 = vadd.f32 %v1059, %v1125
        %v1165 = vadd.f32 %v1060, %v1126
        %v1166 = vadd.f32 %v1061, %v1127
        %v1167 = vadd.f32 %v1062, %v1106
        %v1168 = vadd.f32 %v1063, %v1128
        %v1169 = vadd.f32 %v1064, %v1129
        %v1170 = vadd.f32 %v1065, %v1130
        %v1171 = vadd.f32 %v1066, %v1131
        %v1172 = vmul.f32 %v699, 0.054488685
        %v1173 = vmul.f32 %v705, 0.054488685
        %v1174 = vmul.f32 %v711, 0.054488685
        %v1175 = vmul.f32 %v717, 0.054488685
        %1196 = vrot.lane.b32.xlu0 %v794, 64
        %v1197 = vpop.permute.xlu0 %1196
        %1198 = vrot.lane.b32.xlu0 %v795, 64
        %v1199 = vpop.permute.xlu0 %1198
        %1200 = vrot.lane.b32.xlu0 %v796, 64
        %v1201 = vpop.permute.xlu0 %1200
        %1202 = vrot.lane.b32.xlu0 %v797, 64
        %v1203 = vpop.permute.xlu0 %1202
        %1204 = vrot.lane.b32.xlu0 %v1172, 64
        %v1205 = vpop.permute.xlu0 %1204
        %1206 = vrot.lane.b32.xlu0 %v799, 64
        %v1207 = vpop.permute.xlu0 %1206
        %1208 = vrot.lane.b32.xlu0 %v800, 64
        %v1209 = vpop.permute.xlu0 %1208
        %1210 = vrot.lane.b32.xlu0 %v801, 64
        %v1211 = vpop.permute.xlu0 %1210
        %1212 = vrot.lane.b32.xlu0 %v802, 64
        %v1213 = vpop.permute.xlu0 %1212
        %1214 = vrot.lane.b32.xlu0 %v1173, 64
        %v1215 = vpop.permute.xlu0 %1214
        %1216 = vrot.lane.b32.xlu0 %v804, 64
        %v1217 = vpop.permute.xlu0 %1216
        %1218 = vrot.lane.b32.xlu0 %v805, 64
        %v1219 = vpop.permute.xlu0 %1218
        %1220 = vrot.lane.b32.xlu0 %v806, 64
        %v1221 = vpop.permute.xlu0 %1220
        %1222 = vrot.lane.b32.xlu0 %v807, 64
        %v1223 = vpop.permute.xlu0 %1222
        %1224 = vrot.lane.b32.xlu0 %v1174, 64
        %v1225 = vpop.permute.xlu0 %1224
        %1226 = vrot.lane.b32.xlu0 %v809, 64
        %v1227 = vpop.permute.xlu0 %1226
        %1228 = vrot.lane.b32.xlu0 %v810, 64
        %v1229 = vpop.permute.xlu0 %1228
        %1230 = vrot.lane.b32.xlu0 %v811, 64
        %v1231 = vpop.permute.xlu0 %1230
        %1232 = vrot.lane.b32.xlu0 %v812, 64
        %v1233 = vpop.permute.xlu0 %1232
        %1234 = vrot.lane.b32.xlu0 %v1175, 64
        %v1235 = vpop.permute.xlu0 %1234
        %vm1236 = vcmask 523264
        %v1237 = vsel %vm1236, %v1197, %v1199
        %v1238 = vsel %vm1236, %v1199, %v1201
        %v1239 = vsel %vm1236, %v1201, %v1203
        %v1240 = vsel %vm1236, %v1203, %v1205
        %v1241 = vsel %vm1236, %v1207, %v1209
        %v1242 = vsel %vm1236, %v1209, %v1211
        %v1243 = vsel %vm1236, %v1211, %v1213
        %v1244 = vsel %vm1236, %v1213, %v1215
        %v1245 = vsel %vm1236, %v1217, %v1219
        %v1246 = vsel %vm1236, %v1219, %v1221
        %v1247 = vsel %vm1236, %v1221, %v1223
        %v1248 = vsel %vm1236, %v1223, %v1225
        %v1249 = vsel %vm1236, %v1227, %v1229
        %v1250 = vsel %vm1236, %v1229, %v1231
        %v1251 = vsel %vm1236, %v1231, %v1233
        %v1252 = vsel %vm1236, %v1233, %v1235
        %v1273 = vadd.f32 %v1152, %v1197
        %v1274 = vadd.f32 %v1153, %v1237
        %v1275 = vadd.f32 %v1154, %v1238
        %v1276 = vadd.f32 %v1155, %v1239
        %v1277 = vadd.f32 %v1156, %v1240
        %v1278 = vadd.f32 %v1157, %v1207
        %v1279 = vadd.f32 %v1158, %v1241
        %v1280 = vadd.f32 %v1159, %v1242
        %v1281 = vadd.f32 %v1160, %v1243
        %v1282 = vadd.f32 %v1161, %v1244
        %v1283 = vadd.f32 %v1162, %v1217
        %v1284 = vadd.f32 %v1163, %v1245
        %v1285 = vadd.f32 %v1164, %v1246
        %v1286 = vadd.f32 %v1165, %v1247
        %v1287 = vadd.f32 %v1166, %v1248
        %v1288 = vadd.f32 %v1167, %v1227
        %v1289 = vadd.f32 %v1168, %v1249
        %v1290 = vadd.f32 %v1169, %v1250
        %v1291 = vadd.f32 %v1170, %v1251
        %v1292 = vadd.f32 %v1171, %v1252
        %v1293 = vstv %s792
        %v1294 = vmul.f32 %v1293, %v1273
        %v1295 = vmul.f32 %v1293, %v1274
        %v1296 = vmul.f32 %v1293, %v1275
        %v1297 = vmul.f32 %v1293, %v1276
        %v1298 = vmul.f32 %v1293, %v1277
        %v1299 = vmul.f32 %v1293, %v1278
        %v1300 = vmul.f32 %v1293, %v1279
        %v1301 = vmul.f32 %v1293, %v1280
        %v1302 = vmul.f32 %v1293, %v1281
        %v1303 = vmul.f32 %v1293, %v1282
        %v1304 = vmul.f32 %v1293, %v1283
        %v1305 = vmul.f32 %v1293, %v1284
        %v1306 = vmul.f32 %v1293, %v1285
        %v1307 = vmul.f32 %v1293, %v1286
        %v1308 = vmul.f32 %v1293, %v1287
        %v1309 = vmul.f32 %v1293, %v1288
        %v1310 = vmul.f32 %v1293, %v1289
        %v1311 = vmul.f32 %v1293, %v1290
        %v1312 = vmul.f32 %v1293, %v1291
        %v1313 = vmul.f32 %v1293, %v1292
        %s1314 = sadd.s32 %s791, 1
        %s1315 = sld [smem:[#allocation4 + %s1314]]
        %v1316 = vmul.f32 %v399, 0.15246914
        %v1317 = vmul.f32 %v401, 0.15246914
        %v1318 = vmul.f32 %v560, 0.15246914
        %v1319 = vmul.f32 %v562, 0.15246914
        %v1320 = vmul.f32 %v721, 0.15246914
        %v1321 = vmul.f32 %v405, 0.15246914
        %v1322 = vmul.f32 %v407, 0.15246914
        %v1323 = vmul.f32 %v566, 0.15246914
        %v1324 = vmul.f32 %v568, 0.15246914
        %v1325 = vmul.f32 %v727, 0.15246914
        %v1326 = vmul.f32 %v411, 0.15246914
        %v1327 = vmul.f32 %v413, 0.15246914
        %v1328 = vmul.f32 %v572, 0.15246914
        %v1329 = vmul.f32 %v574, 0.15246914
        %v1330 = vmul.f32 %v733, 0.15246914
        %v1331 = vmul.f32 %v417, 0.15246914
        %v1332 = vmul.f32 %v419, 0.15246914
        %v1333 = vmul.f32 %v578, 0.15246914
        %v1334 = vmul.f32 %v580, 0.15246914
        %v1335 = vmul.f32 %v739, 0.15246914
        %v1336 = vmul.f32 %v399, 0.22184129
        %v1337 = vmul.f32 %v401, 0.22184129
        %v1338 = vmul.f32 %v560, 0.22184129
        %v1339 = vmul.f32 %v562, 0.22184129
        %v1340 = vmul.f32 %v721, 0.22184129
        %v1341 = vmul.f32 %v405, 0.22184129
        %v1342 = vmul.f32 %v407, 0.22184129
        %v1343 = vmul.f32 %v566, 0.22184129
        %v1344 = vmul.f32 %v568, 0.22184129
        %v1345 = vmul.f32 %v727, 0.22184129
        %v1346 = vmul.f32 %v411, 0.22184129
        %v1347 = vmul.f32 %v413, 0.22184129
        %v1348 = vmul.f32 %v572, 0.22184129
        %v1349 = vmul.f32 %v574, 0.22184129
        %v1350 = vmul.f32 %v733, 0.22184129
        %v1351 = vmul.f32 %v417, 0.22184129
        %v1352 = vmul.f32 %v419, 0.22184129
        %v1353 = vmul.f32 %v578, 0.22184129
        %v1354 = vmul.f32 %v580, 0.22184129
        %v1355 = vmul.f32 %v739, 0.22184129
        %1376 = vrot.lane.b32.xlu0 %v1336, 96
        %v1377 = vpop.permute.xlu0 %1376
        %1378 = vrot.lane.b32.xlu0 %v1337, 96
        %v1379 = vpop.permute.xlu0 %1378
        %1380 = vrot.lane.b32.xlu0 %v1338, 96
        %v1381 = vpop.permute.xlu0 %1380
        %1382 = vrot.lane.b32.xlu0 %v1339, 96
        %v1383 = vpop.permute.xlu0 %1382
        %1384 = vrot.lane.b32.xlu0 %v1340, 96
        %v1385 = vpop.permute.xlu0 %1384
        %1386 = vrot.lane.b32.xlu0 %v1341, 96
        %v1387 = vpop.permute.xlu0 %1386
        %1388 = vrot.lane.b32.xlu0 %v1342, 96
        %v1389 = vpop.permute.xlu0 %1388
        %1390 = vrot.lane.b32.xlu0 %v1343, 96
        %v1391 = vpop.permute.xlu0 %1390
        %1392 = vrot.lane.b32.xlu0 %v1344, 96
        %v1393 = vpop.permute.xlu0 %1392
        %1394 = vrot.lane.b32.xlu0 %v1345, 96
        %v1395 = vpop.permute.xlu0 %1394
        %1396 = vrot.lane.b32.xlu0 %v1346, 96
        %v1397 = vpop.permute.xlu0 %1396
        %1398 = vrot.lane.b32.xlu0 %v1347, 96
        %v1399 = vpop.permute.xlu0 %1398
        %1400 = vrot.lane.b32.xlu0 %v1348, 96
        %v1401 = vpop.permute.xlu0 %1400
        %1402 = vrot.lane.b32.xlu0 %v1349, 96
        %v1403 = vpop.permute.xlu0 %1402
        %1404 = vrot.lane.b32.xlu0 %v1350, 96
        %v1405 = vpop.permute.xlu0 %1404
        %1406 = vrot.lane.b32.xlu0 %v1351, 96
        %v1407 = vpop.permute.xlu0 %1406
        %1408 = vrot.lane.b32.xlu0 %v1352, 96
        %v1409 = vpop.permute.xlu0 %1408
        %1410 = vrot.lane.b32.xlu0 %v1353, 96
        %v1411 = vpop.permute.xlu0 %1410
        %1412 = vrot.lane.b32.xlu0 %v1354, 96
        %v1413 = vpop.permute.xlu0 %1412
        %1414 = vrot.lane.b32.xlu0 %v1355, 96
        %v1415 = vpop.permute.xlu0 %1414
        %v1416 = vsel %vm1014, %v1377, %v1379
        %v1417 = vsel %vm1014, %v1379, %v1381
        %v1418 = vsel %vm1014, %v1381, %v1383
        %v1419 = vsel %vm1014, %v1383, %v1385
        %v1420 = vsel %vm1014, %v1387, %v1389
        %v1421 = vsel %vm1014, %v1389, %v1391
        %v1422 = vsel %vm1014, %v1391, %v1393
        %v1423 = vsel %vm1014, %v1393, %v1395
        %v1424 = vsel %vm1014, %v1397, %v1399
        %v1425 = vsel %vm1014, %v1399, %v1401
        %v1426 = vsel %vm1014, %v1401, %v1403
        %v1427 = vsel %vm1014, %v1403, %v1405
        %v1428 = vsel %vm1014, %v1407, %v1409
        %v1429 = vsel %vm1014, %v1409, %v1411
        %v1430 = vsel %vm1014, %v1411, %v1413
        %v1431 = vsel %vm1014, %v1413, %v1415
        %v1452 = vadd.f32 %v1316, %v1416
        %v1453 = vadd.f32 %v1317, %v1417
        %v1454 = vadd.f32 %v1318, %v1418
        %v1455 = vadd.f32 %v1319, %v1419
        %v1456 = vadd.f32 %v1320, %v1385
        %v1457 = vadd.f32 %v1321, %v1420
        %v1458 = vadd.f32 %v1322, %v1421
        %v1459 = vadd.f32 %v1323, %v1422
        %v1460 = vadd.f32 %v1324, %v1423
        %v1461 = vadd.f32 %v1325, %v1395
        %v1462 = vadd.f32 %v1326, %v1424
        %v1463 = vadd.f32 %v1327, %v1425
        %v1464 = vadd.f32 %v1328, %v1426
        %v1465 = vadd.f32 %v1329, %v1427
        %v1466 = vadd.f32 %v1330, %v1405
        %v1467 = vadd.f32 %v1331, %v1428
        %v1468 = vadd.f32 %v1332, %v1429
        %v1469 = vadd.f32 %v1333, %v1430
        %v1470 = vadd.f32 %v1334, %v1431
        %v1471 = vadd.f32 %v1335, %v1415
        %v1472 = vmul.f32 %v401, 0.25137913
        %v1473 = vmul.f32 %v560, 0.25137913
        %v1474 = vmul.f32 %v562, 0.25137913
        %v1475 = vmul.f32 %v721, 0.25137913
        %v1476 = vmul.f32 %v407, 0.25137913
        %v1477 = vmul.f32 %v566, 0.25137913
        %v1478 = vmul.f32 %v568, 0.25137913
        %v1479 = vmul.f32 %v727, 0.25137913
        %v1480 = vmul.f32 %v413, 0.25137913
        %v1481 = vmul.f32 %v572, 0.25137913
        %v1482 = vmul.f32 %v574, 0.25137913
        %v1483 = vmul.f32 %v733, 0.25137913
        %v1484 = vmul.f32 %v419, 0.25137913
        %v1485 = vmul.f32 %v578, 0.25137913
        %v1486 = vmul.f32 %v580, 0.25137913
        %v1487 = vmul.f32 %v739, 0.25137913
        %1504 = vrot.lane.b32.xlu0 %v1472, 64
        %v1505 = vpop.permute.xlu0 %1504
        %1506 = vrot.lane.b32.xlu0 %v1473, 64
        %v1507 = vpop.permute.xlu0 %1506
        %1508 = vrot.lane.b32.xlu0 %v1474, 64
        %v1509 = vpop.permute.xlu0 %1508
        %1510 = vrot.lane.b32.xlu0 %v1475, 64
        %v1511 = vpop.permute.xlu0 %1510
        %1512 = vrot.lane.b32.xlu0 %v1476, 64
        %v1513 = vpop.permute.xlu0 %1512
        %1514 = vrot.lane.b32.xlu0 %v1477, 64
        %v1515 = vpop.permute.xlu0 %1514
        %1516 = vrot.lane.b32.xlu0 %v1478, 64
        %v1517 = vpop.permute.xlu0 %1516
        %1518 = vrot.lane.b32.xlu0 %v1479, 64
        %v1519 = vpop.permute.xlu0 %1518
        %1520 = vrot.lane.b32.xlu0 %v1480, 64
        %v1521 = vpop.permute.xlu0 %1520
        %1522 = vrot.lane.b32.xlu0 %v1481, 64
        %v1523 = vpop.permute.xlu0 %1522
        %1524 = vrot.lane.b32.xlu0 %v1482, 64
        %v1525 = vpop.permute.xlu0 %1524
        %1526 = vrot.lane.b32.xlu0 %v1483, 64
        %v1527 = vpop.permute.xlu0 %1526
        %1528 = vrot.lane.b32.xlu0 %v1484, 64
        %v1529 = vpop.permute.xlu0 %1528
        %1530 = vrot.lane.b32.xlu0 %v1485, 64
        %v1531 = vpop.permute.xlu0 %1530
        %1532 = vrot.lane.b32.xlu0 %v1486, 64
        %v1533 = vpop.permute.xlu0 %1532
        %1534 = vrot.lane.b32.xlu0 %v1487, 64
        %v1535 = vpop.permute.xlu0 %1534
        %v1536 = vsel %vm1236, %v1505, %v1507
        %v1537 = vsel %vm1236, %v1507, %v1509
        %v1538 = vsel %vm1236, %v1509, %v1511
        %v1539 = vsel %vm1236, %v1513, %v1515
        %v1540 = vsel %vm1236, %v1515, %v1517
        %v1541 = vsel %vm1236, %v1517, %v1519
        %v1542 = vsel %vm1236, %v1521, %v1523
        %v1543 = vsel %vm1236, %v1523, %v1525
        %v1544 = vsel %vm1236, %v1525, %v1527
        %v1545 = vsel %vm1236, %v1529, %v1531
        %v1546 = vsel %vm1236, %v1531, %v1533
        %v1547 = vsel %vm1236, %v1533, %v1535
        %v1568 = vadd.f32 %v1452, %v1505
        %v1569 = vadd.f32 %v1453, %v1536
        %v1570 = vadd.f32 %v1454, %v1537
        %v1571 = vadd.f32 %v1455, %v1538
        %v1572 = vadd.f32 %v1456, %v1511
        %v1573 = vadd.f32 %v1457, %v1513
        %v1574 = vadd.f32 %v1458, %v1539
        %v1575 = vadd.f32 %v1459, %v1540
        %v1576 = vadd.f32 %v1460, %v1541
        %v1577 = vadd.f32 %v1461, %v1519
        %v1578 = vadd.f32 %v1462, %v1521
        %v1579 = vadd.f32 %v1463, %v1542
        %v1580 = vadd.f32 %v1464, %v1543
        %v1581 = vadd.f32 %v1465, %v1544
        %v1582 = vadd.f32 %v1466, %v1527
        %v1583 = vadd.f32 %v1467, %v1529
        %v1584 = vadd.f32 %v1468, %v1545
        %v1585 = vadd.f32 %v1469, %v1546
        %v1586 = vadd.f32 %v1470, %v1547
        %v1587 = vadd.f32 %v1471, %v1535
        %v1588 = vmul.f32 %v723, 0.22184129
        %v1589 = vmul.f32 %v729, 0.22184129
        %v1590 = vmul.f32 %v735, 0.22184129
        %v1591 = vmul.f32 %v741, 0.22184129
        %1596 = vrot.lane.b32.xlu0 %v1337, 32
        %v1597 = vpop.permute.xlu0 %1596
        %1598 = vrot.lane.b32.xlu0 %v1338, 32
        %v1599 = vpop.permute.xlu0 %1598
        %1600 = vrot.lane.b32.xlu0 %v1339, 32
        %v1601 = vpop.permute.xlu0 %1600
        %1602 = vrot.lane.b32.xlu0 %v1340, 32
        %v1603 = vpop.permute.xlu0 %1602
        %1604 = vrot.lane.b32.xlu0 %v1588, 32
        %v1605 = vpop.permute.xlu0 %1604
        %1606 = vrot.lane.b32.xlu0 %v1342, 32
        %v1607 = vpop.permute.xlu0 %1606
        %1608 = vrot.lane.b32.xlu0 %v1343, 32
        %v1609 = vpop.permute.xlu0 %1608
        %1610 = vrot.lane.b32.xlu0 %v1344, 32
        %v1611 = vpop.permute.xlu0 %1610
        %1612 = vrot.lane.b32.xlu0 %v1345, 32
        %v1613 = vpop.permute.xlu0 %1612
        %1614 = vrot.lane.b32.xlu0 %v1589, 32
        %v1615 = vpop.permute.xlu0 %1614
        %1616 = vrot.lane.b32.xlu0 %v1347, 32
        %v1617 = vpop.permute.xlu0 %1616
        %1618 = vrot.lane.b32.xlu0 %v1348, 32
        %v1619 = vpop.permute.xlu0 %1618
        %1620 = vrot.lane.b32.xlu0 %v1349, 32
        %v1621 = vpop.permute.xlu0 %1620
        %1622 = vrot.lane.b32.xlu0 %v1350, 32
        %v1623 = vpop.permute.xlu0 %1622
        %1624 = vrot.lane.b32.xlu0 %v1590, 32
        %v1625 = vpop.permute.xlu0 %1624
        %1626 = vrot.lane.b32.xlu0 %v1352, 32
        %v1627 = vpop.permute.xlu0 %1626
        %1628 = vrot.lane.b32.xlu0 %v1353, 32
        %v1629 = vpop.permute.xlu0 %1628
        %1630 = vrot.lane.b32.xlu0 %v1354, 32
        %v1631 = vpop.permute.xlu0 %1630
        %1632 = vrot.lane.b32.xlu0 %v1355, 32
        %v1633 = vpop.permute.xlu0 %1632
        %1634 = vrot.lane.b32.xlu0 %v1591, 32
        %v1635 = vpop.permute.xlu0 %1634
        %vm1636 = vcmask 261120
        %v1637 = vsel %vm1636, %v1597, %v1599
        %v1638 = vsel %vm1636, %v1599, %v1601
        %v1639 = vsel %vm1636, %v1601, %v1603
        %v1640 = vsel %vm1636, %v1603, %v1605
        %v1641 = vsel %vm1636, %v1607, %v1609
        %v1642 = vsel %vm1636, %v1609, %v1611
        %v1643 = vsel %vm1636, %v1611, %v1613
        %v1644 = vsel %vm1636, %v1613, %v1615
        %v1645 = vsel %vm1636, %v1617, %v1619
        %v1646 = vsel %vm1636, %v1619, %v1621
        %v1647 = vsel %vm1636, %v1621, %v1623
        %v1648 = vsel %vm1636, %v1623, %v1625
        %v1649 = vsel %vm1636, %v1627, %v1629
        %v1650 = vsel %vm1636, %v1629, %v1631
        %v1651 = vsel %vm1636, %v1631, %v1633
        %v1652 = vsel %vm1636, %v1633, %v1635
        %v1673 = vadd.f32 %v1568, %v1597
        %v1674 = vadd.f32 %v1569, %v1637
        %v1675 = vadd.f32 %v1570, %v1638
        %v1676 = vadd.f32 %v1571, %v1639
        %v1677 = vadd.f32 %v1572, %v1640
        %v1678 = vadd.f32 %v1573, %v1607
        %v1679 = vadd.f32 %v1574, %v1641
        %v1680 = vadd.f32 %v1575, %v1642
        %v1681 = vadd.f32 %v1576, %v1643
        %v1682 = vadd.f32 %v1577, %v1644
        %v1683 = vadd.f32 %v1578, %v1617
        %v1684 = vadd.f32 %v1579, %v1645
        %v1685 = vadd.f32 %v1580, %v1646
        %v1686 = vadd.f32 %v1581, %v1647
        %v1687 = vadd.f32 %v1582, %v1648
        %v1688 = vadd.f32 %v1583, %v1627
        %v1689 = vadd.f32 %v1584, %v1649
        %v1690 = vadd.f32 %v1585, %v1650
        %v1691 = vadd.f32 %v1586, %v1651
        %v1692 = vadd.f32 %v1587, %v1652
        %v1693 = vmul.f32 %v723, 0.15246914
        %v1694 = vmul.f32 %v729, 0.15246914
        %v1695 = vmul.f32 %v735, 0.15246914
        %v1696 = vmul.f32 %v741, 0.15246914
        %v1697 = vadd.f32 %v1673, %v1317
        %v1698 = vadd.f32 %v1674, %v1318
        %v1699 = vadd.f32 %v1675, %v1319
        %v1700 = vadd.f32 %v1676, %v1320
        %v1701 = vadd.f32 %v1677, %v1693
        %v1702 = vadd.f32 %v1678, %v1322
        %v1703 = vadd.f32 %v1679, %v1323
        %v1704 = vadd.f32 %v1680, %v1324
        %v1705 = vadd.f32 %v1681, %v1325
        %v1706 = vadd.f32 %v1682, %v1694
        %v1707 = vadd.f32 %v1683, %v1327
        %v1708 = vadd.f32 %v1684, %v1328
        %v1709 = vadd.f32 %v1685, %v1329
        %v1710 = vadd.f32 %v1686, %v1330
        %v1711 = vadd.f32 %v1687, %v1695
        %v1712 = vadd.f32 %v1688, %v1332
        %v1713 = vadd.f32 %v1689, %v1333
        %v1714 = vadd.f32 %v1690, %v1334
        %v1715 = vadd.f32 %v1691, %v1335
        %v1716 = vadd.f32 %v1692, %v1696
        %v1717 = vstv %s1315
        %v1718 = vmul.f32 %v1717, %v1697
        %v1719 = vmul.f32 %v1717, %v1698
        %v1720 = vmul.f32 %v1717, %v1699
        %v1721 = vmul.f32 %v1717, %v1700
        %v1722 = vmul.f32 %v1717, %v1701
        %v1723 = vmul.f32 %v1717, %v1702
        %v1724 = vmul.f32 %v1717, %v1703
        %v1725 = vmul.f32 %v1717, %v1704
        %v1726 = vmul.f32 %v1717, %v1705
        %v1727 = vmul.f32 %v1717, %v1706
        %v1728 = vmul.f32 %v1717, %v1707
        %v1729 = vmul.f32 %v1717, %v1708
        %v1730 = vmul.f32 %v1717, %v1709
        %v1731 = vmul.f32 %v1717, %v1710
        %v1732 = vmul.f32 %v1717, %v1711
        %v1733 = vmul.f32 %v1717, %v1712
        %v1734 = vmul.f32 %v1717, %v1713
        %v1735 = vmul.f32 %v1717, %v1714
        %v1736 = vmul.f32 %v1717, %v1715
        %v1737 = vmul.f32 %v1717, %v1716
        %1758 = vrot.lane.b32.xlu0 %v1718, 32
        %v1759 = vpop.permute.xlu0 %1758
        %1760 = vrot.lane.b32.xlu0 %v1719, 32
        %v1761 = vpop.permute.xlu0 %1760
        %1762 = vrot.lane.b32.xlu0 %v1720, 32
        %v1763 = vpop.permute.xlu0 %1762
        %1764 = vrot.lane.b32.xlu0 %v1721, 32
        %v1765 = vpop.permute.xlu0 %1764
        %1766 = vrot.lane.b32.xlu0 %v1722, 32
        %v1767 = vpop.permute.xlu0 %1766
        %1768 = vrot.lane.b32.xlu0 %v1723, 32
        %v1769 = vpop.permute.xlu0 %1768
        %1770 = vrot.lane.b32.xlu0 %v1724, 32
        %v1771 = vpop.permute.xlu0 %1770
        %1772 = vrot.lane.b32.xlu0 %v1725, 32
        %v1773 = vpop.permute.xlu0 %1772
        %1774 = vrot.lane.b32.xlu0 %v1726, 32
        %v1775 = vpop.permute.xlu0 %1774
        %1776 = vrot.lane.b32.xlu0 %v1727, 32
        %v1777 = vpop.permute.xlu0 %1776
        %1778 = vrot.lane.b32.xlu0 %v1728, 32
        %v1779 = vpop.permute.xlu0 %1778
        %1780 = vrot.lane.b32.xlu0 %v1729, 32
        %v1781 = vpop.permute.xlu0 %1780
        %1782 = vrot.lane.b32.xlu0 %v1730, 32
        %v1783 = vpop.permute.xlu0 %1782
        %1784 = vrot.lane.b32.xlu0 %v1731, 32
        %v1785 = vpop.permute.xlu0 %1784
        %1786 = vrot.lane.b32.xlu0 %v1732, 32
        %v1787 = vpop.permute.xlu0 %1786
        %1788 = vrot.lane.b32.xlu0 %v1733, 32
        %v1789 = vpop.permute.xlu0 %1788
        %1790 = vrot.lane.b32.xlu0 %v1734, 32
        %v1791 = vpop.permute.xlu0 %1790
        %1792 = vrot.lane.b32.xlu0 %v1735, 32
        %v1793 = vpop.permute.xlu0 %1792
        %1794 = vrot.lane.b32.xlu0 %v1736, 32
        %v1795 = vpop.permute.xlu0 %1794
        %1796 = vrot.lane.b32.xlu0 %v1737, 32
        %v1797 = vpop.permute.xlu0 %1796
        %v1798 = vsel %vm1636, %v1759, %v1761
        %v1799 = vsel %vm1636, %v1761, %v1763
        %v1800 = vsel %vm1636, %v1763, %v1765
        %v1801 = vsel %vm1636, %v1765, %v1767
        %v1802 = vsel %vm1636, %v1769, %v1771
        %v1803 = vsel %vm1636, %v1771, %v1773
        %v1804 = vsel %vm1636, %v1773, %v1775
        %v1805 = vsel %vm1636, %v1775, %v1777
        %v1806 = vsel %vm1636, %v1779, %v1781
        %v1807 = vsel %vm1636, %v1781, %v1783
        %v1808 = vsel %vm1636, %v1783, %v1785
        %v1809 = vsel %vm1636, %v1785, %v1787
        %v1810 = vsel %vm1636, %v1789, %v1791
        %v1811 = vsel %vm1636, %v1791, %v1793
        %v1812 = vsel %vm1636, %v1793, %v1795
        %v1813 = vsel %vm1636, %v1795, %v1797
        %v1834 = vadd.f32 %v1294, %v1759
        %v1835 = vadd.f32 %v1295, %v1798
        %v1836 = vadd.f32 %v1296, %v1799
        %v1837 = vadd.f32 %v1297, %v1800
        %v1838 = vadd.f32 %v1298, %v1801
        %v1839 = vadd.f32 %v1299, %v1769
        %v1840 = vadd.f32 %v1300, %v1802
        %v1841 = vadd.f32 %v1301, %v1803
        %v1842 = vadd.f32 %v1302, %v1804
        %v1843 = vadd.f32 %v1303, %v1805
        %v1844 = vadd.f32 %v1304, %v1779
        %v1845 = vadd.f32 %v1305, %v1806
        %v1846 = vadd.f32 %v1306, %v1807
        %v1847 = vadd.f32 %v1307, %v1808
        %v1848 = vadd.f32 %v1308, %v1809
        %v1849 = vadd.f32 %v1309, %v1789
        %v1850 = vadd.f32 %v1310, %v1810
        %v1851 = vadd.f32 %v1311, %v1811
        %v1852 = vadd.f32 %v1312, %v1812
        %v1853 = vadd.f32 %v1313, %v1813
        %s1854 = sadd.s32 %s791, 2
        %s1855 = sld [smem:[#allocation4 + %s1854]]
        %v1856 = vmul.f32 %v423, 0.17820325
        %v1857 = vmul.f32 %v425, 0.17820325
        %v1858 = vmul.f32 %v584, 0.17820325
        %v1859 = vmul.f32 %v586, 0.17820325
        %v1860 = vmul.f32 %v745, 0.17820325
        %v1861 = vmul.f32 %v429, 0.17820325
        %v1862 = vmul.f32 %v431, 0.17820325
        %v1863 = vmul.f32 %v590, 0.17820325
        %v1864 = vmul.f32 %v592, 0.17820325
        %v1865 = vmul.f32 %v751, 0.17820325
        %v1866 = vmul.f32 %v435, 0.17820325
        %v1867 = vmul.f32 %v437, 0.17820325
        %v1868 = vmul.f32 %v596, 0.17820325
        %v1869 = vmul.f32 %v598, 0.17820325
        %v1870 = vmul.f32 %v757, 0.17820325
        %v1871 = vmul.f32 %v441, 0.17820325
        %v1872 = vmul.f32 %v443, 0.17820325
        %v1873 = vmul.f32 %v602, 0.17820325
        %v1874 = vmul.f32 %v604, 0.17820325
        %v1875 = vmul.f32 %v763, 0.17820325
        %v1876 = vmul.f32 %v423, 0.21052228
        %v1877 = vmul.f32 %v425, 0.21052228
        %v1878 = vmul.f32 %v584, 0.21052228
        %v1879 = vmul.f32 %v586, 0.21052228
        %v1880 = vmul.f32 %v745, 0.21052228
        %v1881 = vmul.f32 %v429, 0.21052228
        %v1882 = vmul.f32 %v431, 0.21052228
        %v1883 = vmul.f32 %v590, 0.21052228
        %v1884 = vmul.f32 %v592, 0.21052228
        %v1885 = vmul.f32 %v751, 0.21052228
        %v1886 = vmul.f32 %v435, 0.21052228
        %v1887 = vmul.f32 %v437, 0.21052228
        %v1888 = vmul.f32 %v596, 0.21052228
        %v1889 = vmul.f32 %v598, 0.21052228
        %v1890 = vmul.f32 %v757, 0.21052228
        %v1891 = vmul.f32 %v441, 0.21052228
        %v1892 = vmul.f32 %v443, 0.21052228
        %v1893 = vmul.f32 %v602, 0.21052228
        %v1894 = vmul.f32 %v604, 0.21052228
        %v1895 = vmul.f32 %v763, 0.21052228
        %1916 = vrot.lane.b32.xlu0 %v1876, 80
        %v1917 = vpop.permute.xlu0 %1916
        %1918 = vrot.lane.b32.xlu0 %v1877, 80
        %v1919 = vpop.permute.xlu0 %1918
        %1920 = vrot.lane.b32.xlu0 %v1878, 80
        %v1921 = vpop.permute.xlu0 %1920
        %1922 = vrot.lane.b32.xlu0 %v1879, 80
        %v1923 = vpop.permute.xlu0 %1922
        %1924 = vrot.lane.b32.xlu0 %v1880, 80
        %v1925 = vpop.permute.xlu0 %1924
        %1926 = vrot.lane.b32.xlu0 %v1881, 80
        %v1927 = vpop.permute.xlu0 %1926
        %1928 = vrot.lane.b32.xlu0 %v1882, 80
        %v1929 = vpop.permute.xlu0 %1928
        %1930 = vrot.lane.b32.xlu0 %v1883, 80
        %v1931 = vpop.permute.xlu0 %1930
        %1932 = vrot.lane.b32.xlu0 %v1884, 80
        %v1933 = vpop.permute.xlu0 %1932
        %1934 = vrot.lane.b32.xlu0 %v1885, 80
        %v1935 = vpop.permute.xlu0 %1934
        %1936 = vrot.lane.b32.xlu0 %v1886, 80
        %v1937 = vpop.permute.xlu0 %1936
        %1938 = vrot.lane.b32.xlu0 %v1887, 80
        %v1939 = vpop.permute.xlu0 %1938
        %1940 = vrot.lane.b32.xlu0 %v1888, 80
        %v1941 = vpop.permute.xlu0 %1940
        %1942 = vrot.lane.b32.xlu0 %v1889, 80
        %v1943 = vpop.permute.xlu0 %1942
        %1944 = vrot.lane.b32.xlu0 %v1890, 80
        %v1945 = vpop.permute.xlu0 %1944
        %1946 = vrot.lane.b32.xlu0 %v1891, 80
        %v1947 = vpop.permute.xlu0 %1946
        %1948 = vrot.lane.b32.xlu0 %v1892, 80
        %v1949 = vpop.permute.xlu0 %1948
        %1950 = vrot.lane.b32.xlu0 %v1893, 80
        %v1951 = vpop.permute.xlu0 %1950
        %1952 = vrot.lane.b32.xlu0 %v1894, 80
        %v1953 = vpop.permute.xlu0 %1952
        %1954 = vrot.lane.b32.xlu0 %v1895, 80
        %v1955 = vpop.permute.xlu0 %1954
        %v1956 = vsel %vm1115, %v1917, %v1919
        %v1957 = vsel %vm1115, %v1919, %v1921
        %v1958 = vsel %vm1115, %v1921, %v1923
        %v1959 = vsel %vm1115, %v1923, %v1925
        %v1960 = vsel %vm1115, %v1927, %v1929
        %v1961 = vsel %vm1115, %v1929, %v1931
        %v1962 = vsel %vm1115, %v1931, %v1933
        %v1963 = vsel %vm1115, %v1933, %v1935
        %v1964 = vsel %vm1115, %v1937, %v1939
        %v1965 = vsel %vm1115, %v1939, %v1941
        %v1966 = vsel %vm1115, %v1941, %v1943
        %v1967 = vsel %vm1115, %v1943, %v1945
        %v1968 = vsel %vm1115, %v1947, %v1949
        %v1969 = vsel %vm1115, %v1949, %v1951
        %v1970 = vsel %vm1115, %v1951, %v1953
        %v1971 = vsel %vm1115, %v1953, %v1955
        %v1992 = vadd.f32 %v1856, %v1956
        %v1993 = vadd.f32 %v1857, %v1957
        %v1994 = vadd.f32 %v1858, %v1958
        %v1995 = vadd.f32 %v1859, %v1959
        %v1996 = vadd.f32 %v1860, %v1925
        %v1997 = vadd.f32 %v1861, %v1960
        %v1998 = vadd.f32 %v1862, %v1961
        %v1999 = vadd.f32 %v1863, %v1962
        %v2000 = vadd.f32 %v1864, %v1963
        %v2001 = vadd.f32 %v1865, %v1935
        %v2002 = vadd.f32 %v1866, %v1964
        %v2003 = vadd.f32 %v1867, %v1965
        %v2004 = vadd.f32 %v1868, %v1966
        %v2005 = vadd.f32 %v1869, %v1967
        %v2006 = vadd.f32 %v1870, %v1945
        %v2007 = vadd.f32 %v1871, %v1968
        %v2008 = vadd.f32 %v1872, %v1969
        %v2009 = vadd.f32 %v1873, %v1970
        %v2010 = vadd.f32 %v1874, %v1971
        %v2011 = vadd.f32 %v1875, %v1955
        %v2012 = vmul.f32 %v425, 0.22254893
        %v2013 = vmul.f32 %v584, 0.22254893
        %v2014 = vmul.f32 %v586, 0.22254893
        %v2015 = vmul.f32 %v745, 0.22254893
        %v2016 = vmul.f32 %v431, 0.22254893
        %v2017 = vmul.f32 %v590, 0.22254893
        %v2018 = vmul.f32 %v592, 0.22254893
        %v2019 = vmul.f32 %v751, 0.22254893
        %v2020 = vmul.f32 %v437, 0.22254893
        %v2021 = vmul.f32 %v596, 0.22254893
        %v2022 = vmul.f32 %v598, 0.22254893
        %v2023 = vmul.f32 %v757, 0.22254893
        %v2024 = vmul.f32 %v443, 0.22254893
        %v2025 = vmul.f32 %v602, 0.22254893
        %v2026 = vmul.f32 %v604, 0.22254893
        %v2027 = vmul.f32 %v763, 0.22254893
        %2044 = vrot.lane.b32.xlu0 %v2012, 32
        %v2045 = vpop.permute.xlu0 %2044
        %2046 = vrot.lane.b32.xlu0 %v2013, 32
        %v2047 = vpop.permute.xlu0 %2046
        %2048 = vrot.lane.b32.xlu0 %v2014, 32
        %v2049 = vpop.permute.xlu0 %2048
        %2050 = vrot.lane.b32.xlu0 %v2015, 32
        %v2051 = vpop.permute.xlu0 %2050
        %2052 = vrot.lane.b32.xlu0 %v2016, 32
        %v2053 = vpop.permute.xlu0 %2052
        %2054 = vrot.lane.b32.xlu0 %v2017, 32
        %v2055 = vpop.permute.xlu0 %2054
        %2056 = vrot.lane.b32.xlu0 %v2018, 32
        %v2057 = vpop.permute.xlu0 %2056
        %2058 = vrot.lane.b32.xlu0 %v2019, 32
        %v2059 = vpop.permute.xlu0 %2058
        %2060 = vrot.lane.b32.xlu0 %v2020, 32
        %v2061 = vpop.permute.xlu0 %2060
        %2062 = vrot.lane.b32.xlu0 %v2021, 32
        %v2063 = vpop.permute.xlu0 %2062
        %2064 = vrot.lane.b32.xlu0 %v2022, 32
        %v2065 = vpop.permute.xlu0 %2064
        %2066 = vrot.lane.b32.xlu0 %v2023, 32
        %v2067 = vpop.permute.xlu0 %2066
        %2068 = vrot.lane.b32.xlu0 %v2024, 32
        %v2069 = vpop.permute.xlu0 %2068
        %2070 = vrot.lane.b32.xlu0 %v2025, 32
        %v2071 = vpop.permute.xlu0 %2070
        %2072 = vrot.lane.b32.xlu0 %v2026, 32
        %v2073 = vpop.permute.xlu0 %2072
        %2074 = vrot.lane.b32.xlu0 %v2027, 32
        %v2075 = vpop.permute.xlu0 %2074
        %v2076 = vsel %vm1636, %v2045, %v2047
        %v2077 = vsel %vm1636, %v2047, %v2049
        %v2078 = vsel %vm1636, %v2049, %v2051
        %v2079 = vsel %vm1636, %v2053, %v2055
        %v2080 = vsel %vm1636, %v2055, %v2057
        %v2081 = vsel %vm1636, %v2057, %v2059
        %v2082 = vsel %vm1636, %v2061, %v2063
        %v2083 = vsel %vm1636, %v2063, %v2065
        %v2084 = vsel %vm1636, %v2065, %v2067
        %v2085 = vsel %vm1636, %v2069, %v2071
        %v2086 = vsel %vm1636, %v2071, %v2073
        %v2087 = vsel %vm1636, %v2073, %v2075
        %v2108 = vadd.f32 %v1992, %v2045
        %v2109 = vadd.f32 %v1993, %v2076
        %v2110 = vadd.f32 %v1994, %v2077
        %v2111 = vadd.f32 %v1995, %v2078
        %v2112 = vadd.f32 %v1996, %v2051
        %v2113 = vadd.f32 %v1997, %v2053
        %v2114 = vadd.f32 %v1998, %v2079
        %v2115 = vadd.f32 %v1999, %v2080
        %v2116 = vadd.f32 %v2000, %v2081
        %v2117 = vadd.f32 %v2001, %v2059
        %v2118 = vadd.f32 %v2002, %v2061
        %v2119 = vadd.f32 %v2003, %v2082
        %v2120 = vadd.f32 %v2004, %v2083
        %v2121 = vadd.f32 %v2005, %v2084
        %v2122 = vadd.f32 %v2006, %v2067
        %v2123 = vadd.f32 %v2007, %v2069
        %v2124 = vadd.f32 %v2008, %v2085
        %v2125 = vadd.f32 %v2009, %v2086
        %v2126 = vadd.f32 %v2010, %v2087
        %v2127 = vadd.f32 %v2011, %v2075
        %v2128 = vmul.f32 %v747, 0.21052228
        %v2129 = vmul.f32 %v753, 0.21052228
        %v2130 = vmul.f32 %v759, 0.21052228
        %v2131 = vmul.f32 %v765, 0.21052228
        %2136 = vrot.lane.b32.xlu0 %v1877, 112
        %v2137 = vpop.permute.xlu0 %2136
        %2138 = vrot.lane.b32.xlu0 %v1878, 112
        %v2139 = vpop.permute.xlu0 %2138
        %2140 = vrot.lane.b32.xlu0 %v1879, 112
        %v2141 = vpop.permute.xlu0 %2140
        %2142 = vrot.lane.b32.xlu0 %v1880, 112
        %v2143 = vpop.permute.xlu0 %2142
        %2144 = vrot.lane.b32.xlu0 %v2128, 112
        %v2145 = vpop.permute.xlu0 %2144
        %2146 = vrot.lane.b32.xlu0 %v1882, 112
        %v2147 = vpop.permute.xlu0 %2146
        %2148 = vrot.lane.b32.xlu0 %v1883, 112
        %v2149 = vpop.permute.xlu0 %2148
        %2150 = vrot.lane.b32.xlu0 %v1884, 112
        %v2151 = vpop.permute.xlu0 %2150
        %2152 = vrot.lane.b32.xlu0 %v1885, 112
        %v2153 = vpop.permute.xlu0 %2152
        %2154 = vrot.lane.b32.xlu0 %v2129, 112
        %v2155 = vpop.permute.xlu0 %2154
        %2156 = vrot.lane.b32.xlu0 %v1887, 112
        %v2157 = vpop.permute.xlu0 %2156
        %2158 = vrot.lane.b32.xlu0 %v1888, 112
        %v2159 = vpop.permute.xlu0 %2158
        %2160 = vrot.lane.b32.xlu0 %v1889, 112
        %v2161 = vpop.permute.xlu0 %2160
        %2162 = vrot.lane.b32.xlu0 %v1890, 112
        %v2163 = vpop.permute.xlu0 %2162
        %2164 = vrot.lane.b32.xlu0 %v2130, 112
        %v2165 = vpop.permute.xlu0 %2164
        %2166 = vrot.lane.b32.xlu0 %v1892, 112
        %v2167 = vpop.permute.xlu0 %2166
        %2168 = vrot.lane.b32.xlu0 %v1893, 112
        %v2169 = vpop.permute.xlu0 %2168
        %2170 = vrot.lane.b32.xlu0 %v1894, 112
        %v2171 = vpop.permute.xlu0 %2170
        %2172 = vrot.lane.b32.xlu0 %v1895, 112
        %v2173 = vpop.permute.xlu0 %2172
        %2174 = vrot.lane.b32.xlu0 %v2131, 112
        %v2175 = vpop.permute.xlu0 %2174
        %v2176 = vsel %vm893, %v2137, %v2139
        %v2177 = vsel %vm893, %v2139, %v2141
        %v2178 = vsel %vm893, %v2141, %v2143
        %v2179 = vsel %vm893, %v2143, %v2145
        %v2180 = vsel %vm893, %v2147, %v2149
        %v2181 = vsel %vm893, %v2149, %v2151
        %v2182 = vsel %vm893, %v2151, %v2153
        %v2183 = vsel %vm893, %v2153, %v2155
        %v2184 = vsel %vm893, %v2157, %v2159
        %v2185 = vsel %vm893, %v2159, %v2161
        %v2186 = vsel %vm893, %v2161, %v2163
        %v2187 = vsel %vm893, %v2163, %v2165
        %v2188 = vsel %vm893, %v2167, %v2169
        %v2189 = vsel %vm893, %v2169, %v2171
        %v2190 = vsel %vm893, %v2171, %v2173
        %v2191 = vsel %vm893, %v2173, %v2175
        %v2212 = vadd.f32 %v2108, %v2176
        %v2213 = vadd.f32 %v2109, %v2177
        %v2214 = vadd.f32 %v2110, %v2178
        %v2215 = vadd.f32 %v2111, %v2179
        %v2216 = vadd.f32 %v2112, %v2145
        %v2217 = vadd.f32 %v2113, %v2180
        %v2218 = vadd.f32 %v2114, %v2181
        %v2219 = vadd.f32 %v2115, %v2182
        %v2220 = vadd.f32 %v2116, %v2183
        %v2221 = vadd.f32 %v2117, %v2155
        %v2222 = vadd.f32 %v2118, %v2184
        %v2223 = vadd.f32 %v2119, %v2185
        %v2224 = vadd.f32 %v2120, %v2186
        %v2225 = vadd.f32 %v2121, %v2187
        %v2226 = vadd.f32 %v2122, %v2165
        %v2227 = vadd.f32 %v2123, %v2188
        %v2228 = vadd.f32 %v2124, %v2189
        %v2229 = vadd.f32 %v2125, %v2190
        %v2230 = vadd.f32 %v2126, %v2191
        %v2231 = vadd.f32 %v2127, %v2175
        %v2232 = vmul.f32 %v747, 0.17820325
        %v2233 = vmul.f32 %v753, 0.17820325
        %v2234 = vmul.f32 %v759, 0.17820325
        %v2235 = vmul.f32 %v765, 0.17820325
        %2256 = vrot.lane.b32.xlu0 %v1857, 64
        %v2257 = vpop.permute.xlu0 %2256
        %2258 = vrot.lane.b32.xlu0 %v1858, 64
        %v2259 = vpop.permute.xlu0 %2258
        %2260 = vrot.lane.b32.xlu0 %v1859, 64
        %v2261 = vpop.permute.xlu0 %2260
        %2262 = vrot.lane.b32.xlu0 %v1860, 64
        %v2263 = vpop.permute.xlu0 %2262
        %2264 = vrot.lane.b32.xlu0 %v2232, 64
        %v2265 = vpop.permute.xlu0 %2264
        %2266 = vrot.lane.b32.xlu0 %v1862, 64
        %v2267 = vpop.permute.xlu0 %2266
        %2268 = vrot.lane.b32.xlu0 %v1863, 64
        %v2269 = vpop.permute.xlu0 %2268
        %2270 = vrot.lane.b32.xlu0 %v1864, 64
        %v2271 = vpop.permute.xlu0 %2270
        %2272 = vrot.lane.b32.xlu0 %v1865, 64
        %v2273 = vpop.permute.xlu0 %2272
        %2274 = vrot.lane.b32.xlu0 %v2233, 64
        %v2275 = vpop.permute.xlu0 %2274
        %2276 = vrot.lane.b32.xlu0 %v1867, 64
        %v2277 = vpop.permute.xlu0 %2276
        %2278 = vrot.lane.b32.xlu0 %v1868, 64
        %v2279 = vpop.permute.xlu0 %2278
        %2280 = vrot.lane.b32.xlu0 %v1869, 64
        %v2281 = vpop.permute.xlu0 %2280
        %2282 = vrot.lane.b32.xlu0 %v1870, 64
        %v2283 = vpop.permute.xlu0 %2282
        %2284 = vrot.lane.b32.xlu0 %v2234, 64
        %v2285 = vpop.permute.xlu0 %2284
        %2286 = vrot.lane.b32.xlu0 %v1872, 64
        %v2287 = vpop.permute.xlu0 %2286
        %2288 = vrot.lane.b32.xlu0 %v1873, 64
        %v2289 = vpop.permute.xlu0 %2288
        %2290 = vrot.lane.b32.xlu0 %v1874, 64
        %v2291 = vpop.permute.xlu0 %2290
        %2292 = vrot.lane.b32.xlu0 %v1875, 64
        %v2293 = vpop.permute.xlu0 %2292
        %2294 = vrot.lane.b32.xlu0 %v2235, 64
        %v2295 = vpop.permute.xlu0 %2294
        %v2296 = vsel %vm1236, %v2257, %v2259
        %v2297 = vsel %vm1236, %v2259, %v2261
        %v2298 = vsel %vm1236, %v2261, %v2263
        %v2299 = vsel %vm1236, %v2263, %v2265
        %v2300 = vsel %vm1236, %v2267, %v2269
        %v2301 = vsel %vm1236, %v2269, %v2271
        %v2302 = vsel %vm1236, %v2271, %v2273
        %v2303 = vsel %vm1236, %v2273, %v2275
        %v2304 = vsel %vm1236, %v2277, %v2279
        %v2305 = vsel %vm1236, %v2279, %v2281
        %v2306 = vsel %vm1236, %v2281, %v2283
        %v2307 = vsel %vm1236, %v2283, %v2285
        %v2308 = vsel %vm1236, %v2287, %v2289
        %v2309 = vsel %vm1236, %v2289, %v2291
        %v2310 = vsel %vm1236, %v2291, %v2293
        %v2311 = vsel %vm1236, %v2293, %v2295
        %v2332 = vadd.f32 %v2212, %v2296
        %v2333 = vadd.f32 %v2213, %v2297
        %v2334 = vadd.f32 %v2214, %v2298
        %v2335 = vadd.f32 %v2215, %v2299
        %v2336 = vadd.f32 %v2216, %v2265
        %v2337 = vadd.f32 %v2217, %v2300
        %v2338 = vadd.f32 %v2218, %v2301
        %v2339 = vadd.f32 %v2219, %v2302
        %v2340 = vadd.f32 %v2220, %v2303
        %v2341 = vadd.f32 %v2221, %v2275
        %v2342 = vadd.f32 %v2222, %v2304
        %v2343 = vadd.f32 %v2223, %v2305
        %v2344 = vadd.f32 %v2224, %v2306
        %v2345 = vadd.f32 %v2225, %v2307
        %v2346 = vadd.f32 %v2226, %v2285
        %v2347 = vadd.f32 %v2227, %v2308
        %v2348 = vadd.f32 %v2228, %v2309
        %v2349 = vadd.f32 %v2229, %v2310
        %v2350 = vadd.f32 %v2230, %v2311
        %v2351 = vadd.f32 %v2231, %v2295
        %v2352 = vstv %s1855
        %v2353 = vmul.f32 %v2352, %v2332
        %v2354 = vmul.f32 %v2352, %v2333
        %v2355 = vmul.f32 %v2352, %v2334
        %v2356 = vmul.f32 %v2352, %v2335
        %v2357 = vmul.f32 %v2352, %v2336
        %v2358 = vmul.f32 %v2352, %v2337
        %v2359 = vmul.f32 %v2352, %v2338
        %v2360 = vmul.f32 %v2352, %v2339
        %v2361 = vmul.f32 %v2352, %v2340
        %v2362 = vmul.f32 %v2352, %v2341
        %v2363 = vmul.f32 %v2352, %v2342
        %v2364 = vmul.f32 %v2352, %v2343
        %v2365 = vmul.f32 %v2352, %v2344
        %v2366 = vmul.f32 %v2352, %v2345
        %v2367 = vmul.f32 %v2352, %v2346
        %v2368 = vmul.f32 %v2352, %v2347
        %v2369 = vmul.f32 %v2352, %v2348
        %v2370 = vmul.f32 %v2352, %v2349
        %v2371 = vmul.f32 %v2352, %v2350
        %v2372 = vmul.f32 %v2352, %v2351
        %2393 = vrot.lane.b32.xlu0 %v2353, 64
        %v2394 = vpop.permute.xlu0 %2393
        %2395 = vrot.lane.b32.xlu0 %v2354, 64
        %v2396 = vpop.permute.xlu0 %2395
        %2397 = vrot.lane.b32.xlu0 %v2355, 64
        %v2398 = vpop.permute.xlu0 %2397
        %2399 = vrot.lane.b32.xlu0 %v2356, 64
        %v2400 = vpop.permute.xlu0 %2399
        %2401 = vrot.lane.b32.xlu0 %v2357, 64
        %v2402 = vpop.permute.xlu0 %2401
        %2403 = vrot.lane.b32.xlu0 %v2358, 64
        %v2404 = vpop.permute.xlu0 %2403
        %2405 = vrot.lane.b32.xlu0 %v2359, 64
        %v2406 = vpop.permute.xlu0 %2405
        %2407 = vrot.lane.b32.xlu0 %v2360, 64
        %v2408 = vpop.permute.xlu0 %2407
        %2409 = vrot.lane.b32.xlu0 %v2361, 64
        %v2410 = vpop.permute.xlu0 %2409
        %2411 = vrot.lane.b32.xlu0 %v2362, 64
        %v2412 = vpop.permute.xlu0 %2411
        %2413 = vrot.lane.b32.xlu0 %v2363, 64
        %v2414 = vpop.permute.xlu0 %2413
        %2415 = vrot.lane.b32.xlu0 %v2364, 64
        %v2416 = vpop.permute.xlu0 %2415
        %2417 = vrot.lane.b32.xlu0 %v2365, 64
        %v2418 = vpop.permute.xlu0 %2417
        %2419 = vrot.lane.b32.xlu0 %v2366, 64
        %v2420 = vpop.permute.xlu0 %2419
        %2421 = vrot.lane.b32.xlu0 %v2367, 64
        %v2422 = vpop.permute.xlu0 %2421
        %2423 = vrot.lane.b32.xlu0 %v2368, 64
        %v2424 = vpop.permute.xlu0 %2423
        %2425 = vrot.lane.b32.xlu0 %v2369, 64
        %v2426 = vpop.permute.xlu0 %2425
        %2427 = vrot.lane.b32.xlu0 %v2370, 64
        %v2428 = vpop.permute.xlu0 %2427
        %2429 = vrot.lane.b32.xlu0 %v2371, 64
        %v2430 = vpop.permute.xlu0 %2429
        %2431 = vrot.lane.b32.xlu0 %v2372, 64
        %v2432 = vpop.permute.xlu0 %2431
        %v2433 = vsel %vm1236, %v2394, %v2396
        %v2434 = vsel %vm1236, %v2396, %v2398
        %v2435 = vsel %vm1236, %v2398, %v2400
        %v2436 = vsel %vm1236, %v2400, %v2402
        %v2437 = vsel %vm1236, %v2404, %v2406
        %v2438 = vsel %vm1236, %v2406, %v2408
        %v2439 = vsel %vm1236, %v2408, %v2410
        %v2440 = vsel %vm1236, %v2410, %v2412
        %v2441 = vsel %vm1236, %v2414, %v2416
        %v2442 = vsel %vm1236, %v2416, %v2418
        %v2443 = vsel %vm1236, %v2418, %v2420
        %v2444 = vsel %vm1236, %v2420, %v2422
        %v2445 = vsel %vm1236, %v2424, %v2426
        %v2446 = vsel %vm1236, %v2426, %v2428
        %v2447 = vsel %vm1236, %v2428, %v2430
        %v2448 = vsel %vm1236, %v2430, %v2432
        %v2469 = vadd.f32 %v1834, %v2394
        %v2470 = vadd.f32 %v1835, %v2433
        %v2471 = vadd.f32 %v1836, %v2434
        %v2472 = vadd.f32 %v1837, %v2435
        %v2473 = vadd.f32 %v1838, %v2436
        %v2474 = vadd.f32 %v1839, %v2404
        %v2475 = vadd.f32 %v1840, %v2437
        %v2476 = vadd.f32 %v1841, %v2438
        %v2477 = vadd.f32 %v1842, %v2439
        %v2478 = vadd.f32 %v1843, %v2440
        %v2479 = vadd.f32 %v1844, %v2414
        %v2480 = vadd.f32 %v1845, %v2441
        %v2481 = vadd.f32 %v1846, %v2442
        %v2482 = vadd.f32 %v1847, %v2443
        %v2483 = vadd.f32 %v1848, %v2444
        %v2484 = vadd.f32 %v1849, %v2424
        %v2485 = vadd.f32 %v1850, %v2445
        %v2486 = vadd.f32 %v1851, %v2446
        %v2487 = vadd.f32 %v1852, %v2447
        %v2488 = vadd.f32 %v1853, %v2448
        %s2489 = sadd.s32 %s791, 3
        %s2490 = sld [smem:[#allocation4 + %s2489]]
        %v2491 = vmul.f32 %v447, 0.18762717
        %v2492 = vmul.f32 %v449, 0.18762717
        %v2493 = vmul.f32 %v608, 0.18762717
        %v2494 = vmul.f32 %v610, 0.18762717
        %v2495 = vmul.f32 %v453, 0.18762717
        %v2496 = vmul.f32 %v455, 0.18762717
        %v2497 = vmul.f32 %v614, 0.18762717
        %v2498 = vmul.f32 %v616, 0.18762717
        %v2499 = vmul.f32 %v459, 0.18762717
        %v2500 = vmul.f32 %v461, 0.18762717
        %v2501 = vmul.f32 %v620, 0.18762717
        %v2502 = vmul.f32 %v622, 0.18762717
        %v2503 = vmul.f32 %v465, 0.18762717
        %v2504 = vmul.f32 %v467, 0.18762717
        %v2505 = vmul.f32 %v626, 0.18762717
        %v2506 = vmul.f32 %v628, 0.18762717
        %v2507 = vmul.f32 %v447, 0.20606813
        %v2508 = vmul.f32 %v449, 0.20606813
        %v2509 = vmul.f32 %v608, 0.20606813
        %v2510 = vmul.f32 %v610, 0.20606813
        %v2511 = vmul.f32 %v769, 0.20606813
        %v2512 = vmul.f32 %v453, 0.20606813
        %v2513 = vmul.f32 %v455, 0.20606813
        %v2514 = vmul.f32 %v614, 0.20606813
        %v2515 = vmul.f32 %v616, 0.20606813
        %v2516 = vmul.f32 %v775, 0.20606813
        %v2517 = vmul.f32 %v459, 0.20606813
        %v2518 = vmul.f32 %v461, 0.20606813
        %v2519 = vmul.f32 %v620, 0.20606813
        %v2520 = vmul.f32 %v622, 0.20606813
        %v2521 = vmul.f32 %v781, 0.20606813
        %v2522 = vmul.f32 %v465, 0.20606813
        %v2523 = vmul.f32 %v467, 0.20606813
        %v2524 = vmul.f32 %v626, 0.20606813
        %v2525 = vmul.f32 %v628, 0.20606813
        %v2526 = vmul.f32 %v787, 0.20606813
        %2547 = vrot.lane.b32.xlu0 %v2507, 64
        %v2548 = vpop.permute.xlu0 %2547
        %2549 = vrot.lane.b32.xlu0 %v2508, 64
        %v2550 = vpop.permute.xlu0 %2549
        %2551 = vrot.lane.b32.xlu0 %v2509, 64
        %v2552 = vpop.permute.xlu0 %2551
        %2553 = vrot.lane.b32.xlu0 %v2510, 64
        %v2554 = vpop.permute.xlu0 %2553
        %2555 = vrot.lane.b32.xlu0 %v2511, 64
        %v2556 = vpop.permute.xlu0 %2555
        %2557 = vrot.lane.b32.xlu0 %v2512, 64
        %v2558 = vpop.permute.xlu0 %2557
        %2559 = vrot.lane.b32.xlu0 %v2513, 64
        %v2560 = vpop.permute.xlu0 %2559
        %2561 = vrot.lane.b32.xlu0 %v2514, 64
        %v2562 = vpop.permute.xlu0 %2561
        %2563 = vrot.lane.b32.xlu0 %v2515, 64
        %v2564 = vpop.permute.xlu0 %2563
        %2565 = vrot.lane.b32.xlu0 %v2516, 64
        %v2566 = vpop.permute.xlu0 %2565
        %2567 = vrot.lane.b32.xlu0 %v2517, 64
        %v2568 = vpop.permute.xlu0 %2567
        %2569 = vrot.lane.b32.xlu0 %v2518, 64
        %v2570 = vpop.permute.xlu0 %2569
        %2571 = vrot.lane.b32.xlu0 %v2519, 64
        %v2572 = vpop.permute.xlu0 %2571
        %2573 = vrot.lane.b32.xlu0 %v2520, 64
        %v2574 = vpop.permute.xlu0 %2573
        %2575 = vrot.lane.b32.xlu0 %v2521, 64
        %v2576 = vpop.permute.xlu0 %2575
        %2577 = vrot.lane.b32.xlu0 %v2522, 64
        %v2578 = vpop.permute.xlu0 %2577
        %2579 = vrot.lane.b32.xlu0 %v2523, 64
        %v2580 = vpop.permute.xlu0 %2579
        %2581 = vrot.lane.b32.xlu0 %v2524, 64
        %v2582 = vpop.permute.xlu0 %2581
        %2583 = vrot.lane.b32.xlu0 %v2525, 64
        %v2584 = vpop.permute.xlu0 %2583
        %2585 = vrot.lane.b32.xlu0 %v2526, 64
        %v2586 = vpop.permute.xlu0 %2585
        %v2587 = vsel %vm1236, %v2548, %v2550
        %v2588 = vsel %vm1236, %v2550, %v2552
        %v2589 = vsel %vm1236, %v2552, %v2554
        %v2590 = vsel %vm1236, %v2554, %v2556
        %v2591 = vsel %vm1236, %v2558, %v2560
        %v2592 = vsel %vm1236, %v2560, %v2562
        %v2593 = vsel %vm1236, %v2562, %v2564
        %v2594 = vsel %vm1236, %v2564, %v2566
        %v2595 = vsel %vm1236, %v2568, %v2570
        %v2596 = vsel %vm1236, %v2570, %v2572
        %v2597 = vsel %vm1236, %v2572, %v2574
        %v2598 = vsel %vm1236, %v2574, %v2576
        %v2599 = vsel %vm1236, %v2578, %v2580
        %v2600 = vsel %vm1236, %v2580, %v2582
        %v2601 = vsel %vm1236, %v2582, %v2584
        %v2602 = vsel %vm1236, %v2584, %v2586
        %v2619 = vadd.f32 %v2491, %v2587
        %v2620 = vadd.f32 %v2492, %v2588
        %v2621 = vadd.f32 %v2493, %v2589
        %v2622 = vadd.f32 %v2494, %v2590
        %v2623 = vadd.f32 %v2495, %v2591
        %v2624 = vadd.f32 %v2496, %v2592
        %v2625 = vadd.f32 %v2497, %v2593
        %v2626 = vadd.f32 %v2498, %v2594
        %v2627 = vadd.f32 %v2499, %v2595
        %v2628 = vadd.f32 %v2500, %v2596
        %v2629 = vadd.f32 %v2501, %v2597
        %v2630 = vadd.f32 %v2502, %v2598
        %v2631 = vadd.f32 %v2503, %v2599
        %v2632 = vadd.f32 %v2504, %v2600
        %v2633 = vadd.f32 %v2505, %v2601
        %v2634 = vadd.f32 %v2506, %v2602
        %v2635 = vmul.f32 %v449, 0.21260943
        %v2636 = vmul.f32 %v608, 0.21260943
        %v2637 = vmul.f32 %v610, 0.21260943
        %v2638 = vmul.f32 %v769, 0.21260943
        %v2639 = vmul.f32 %v455, 0.21260943
        %v2640 = vmul.f32 %v614, 0.21260943
        %v2641 = vmul.f32 %v616, 0.21260943
        %v2642 = vmul.f32 %v775, 0.21260943
        %v2643 = vmul.f32 %v461, 0.21260943
        %v2644 = vmul.f32 %v620, 0.21260943
        %v2645 = vmul.f32 %v622, 0.21260943
        %v2646 = vmul.f32 %v781, 0.21260943
        %v2647 = vmul.f32 %v467, 0.21260943
        %v2648 = vmul.f32 %v626, 0.21260943
        %v2649 = vmul.f32 %v628, 0.21260943
        %v2650 = vmul.f32 %v787, 0.21260943
        %v2651 = vadd.f32 %v2619, %v2635
        %v2652 = vadd.f32 %v2620, %v2636
        %v2653 = vadd.f32 %v2621, %v2637
        %v2654 = vadd.f32 %v2622, %v2638
        %v2655 = vadd.f32 %v2623, %v2639
        %v2656 = vadd.f32 %v2624, %v2640
        %v2657 = vadd.f32 %v2625, %v2641
        %v2658 = vadd.f32 %v2626, %v2642
        %v2659 = vadd.f32 %v2627, %v2643
        %v2660 = vadd.f32 %v2628, %v2644
        %v2661 = vadd.f32 %v2629, %v2645
        %v2662 = vadd.f32 %v2630, %v2646
        %v2663 = vadd.f32 %v2631, %v2647
        %v2664 = vadd.f32 %v2632, %v2648
        %v2665 = vadd.f32 %v2633, %v2649
        %v2666 = vadd.f32 %v2634, %v2650
        %v2667 = vmul.f32 %v771, 0.20606813
        %v2668 = vmul.f32 %v777, 0.20606813
        %v2669 = vmul.f32 %v783, 0.20606813
        %v2670 = vmul.f32 %v789, 0.20606813
        %2675 = vrot.lane.b32.xlu0 %v2667, 64
        %v2676 = vpop.permute.xlu0 %2675
        %2677 = vrot.lane.b32.xlu0 %v2668, 64
        %v2678 = vpop.permute.xlu0 %2677
        %2679 = vrot.lane.b32.xlu0 %v2669, 64
        %v2680 = vpop.permute.xlu0 %2679
        %2681 = vrot.lane.b32.xlu0 %v2670, 64
        %v2682 = vpop.permute.xlu0 %2681
        %v2683 = vsel %vm1236, %v2556, %v2676
        %v2684 = vsel %vm1236, %v2566, %v2678
        %v2685 = vsel %vm1236, %v2576, %v2680
        %v2686 = vsel %vm1236, %v2586, %v2682
        %v2691 = vadd.f32 %v2651, %v2588
        %v2692 = vadd.f32 %v2652, %v2589
        %v2693 = vadd.f32 %v2653, %v2590
        %v2694 = vadd.f32 %v2654, %v2683
        %v2695 = vadd.f32 %v2655, %v2592
        %v2696 = vadd.f32 %v2656, %v2593
        %v2697 = vadd.f32 %v2657, %v2594
        %v2698 = vadd.f32 %v2658, %v2684
        %v2699 = vadd.f32 %v2659, %v2596
        %v2700 = vadd.f32 %v2660, %v2597
        %v2701 = vadd.f32 %v2661, %v2598
        %v2702 = vadd.f32 %v2662, %v2685
        %v2703 = vadd.f32 %v2663, %v2600
        %v2704 = vadd.f32 %v2664, %v2601
        %v2705 = vadd.f32 %v2665, %v2602
        %v2706 = vadd.f32 %v2666, %v2686
        %v2707 = vmul.f32 %v769, 0.18762717
        %v2708 = vmul.f32 %v771, 0.18762717
        %v2709 = vmul.f32 %v775, 0.18762717
        %v2710 = vmul.f32 %v777, 0.18762717
        %v2711 = vmul.f32 %v781, 0.18762717
        %v2712 = vmul.f32 %v783, 0.18762717
        %v2713 = vmul.f32 %v787, 0.18762717
        %v2714 = vmul.f32 %v789, 0.18762717
        %v2715 = vadd.f32 %v2691, %v2493
        %v2716 = vadd.f32 %v2692, %v2494
        %v2717 = vadd.f32 %v2693, %v2707
        %v2718 = vadd.f32 %v2694, %v2708
        %v2719 = vadd.f32 %v2695, %v2497
        %v2720 = vadd.f32 %v2696, %v2498
        %v2721 = vadd.f32 %v2697, %v2709
        %v2722 = vadd.f32 %v2698, %v2710
        %v2723 = vadd.f32 %v2699, %v2501
        %v2724 = vadd.f32 %v2700, %v2502
        %v2725 = vadd.f32 %v2701, %v2711
        %v2726 = vadd.f32 %v2702, %v2712
        %v2727 = vadd.f32 %v2703, %v2505
        %v2728 = vadd.f32 %v2704, %v2506
        %v2729 = vadd.f32 %v2705, %v2713
        %v2730 = vadd.f32 %v2706, %v2714
        %v2731 = vstv %s2490
        %v2732 = vmul.f32 %v2731, %v2715
        %v2733 = vmul.f32 %v2731, %v2716
        %v2734 = vmul.f32 %v2731, %v2717
        %v2735 = vmul.f32 %v2731, %v2718
        %v2736 = vmul.f32 %v2731, %v2719
        %v2737 = vmul.f32 %v2731, %v2720
        %v2738 = vmul.f32 %v2731, %v2721
        %v2739 = vmul.f32 %v2731, %v2722
        %v2740 = vmul.f32 %v2731, %v2723
        %v2741 = vmul.f32 %v2731, %v2724
        %v2742 = vmul.f32 %v2731, %v2725
        %v2743 = vmul.f32 %v2731, %v2726
        %v2744 = vmul.f32 %v2731, %v2727
        %v2745 = vmul.f32 %v2731, %v2728
        %v2746 = vmul.f32 %v2731, %v2729
        %v2747 = vmul.f32 %v2731, %v2730
        %2764 = vrot.lane.b32.xlu0 %v2732, 96
        %v2765 = vpop.permute.xlu0 %2764
        %2766 = vrot.lane.b32.xlu0 %v2733, 96
        %v2767 = vpop.permute.xlu0 %2766
        %2768 = vrot.lane.b32.xlu0 %v2734, 96
        %v2769 = vpop.permute.xlu0 %2768
        %2770 = vrot.lane.b32.xlu0 %v2735, 96
        %v2771 = vpop.permute.xlu0 %2770
        %2772 = vrot.lane.b32.xlu0 %v2736, 96
        %v2773 = vpop.permute.xlu0 %2772
        %2774 = vrot.lane.b32.xlu0 %v2737, 96
        %v2775 = vpop.permute.xlu0 %2774
        %2776 = vrot.lane.b32.xlu0 %v2738, 96
        %v2777 = vpop.permute.xlu0 %2776
        %2778 = vrot.lane.b32.xlu0 %v2739, 96
        %v2779 = vpop.permute.xlu0 %2778
        %2780 = vrot.lane.b32.xlu0 %v2740, 96
        %v2781 = vpop.permute.xlu0 %2780
        %2782 = vrot.lane.b32.xlu0 %v2741, 96
        %v2783 = vpop.permute.xlu0 %2782
        %2784 = vrot.lane.b32.xlu0 %v2742, 96
        %v2785 = vpop.permute.xlu0 %2784
        %2786 = vrot.lane.b32.xlu0 %v2743, 96
        %v2787 = vpop.permute.xlu0 %2786
        %2788 = vrot.lane.b32.xlu0 %v2744, 96
        %v2789 = vpop.permute.xlu0 %2788
        %2790 = vrot.lane.b32.xlu0 %v2745, 96
        %v2791 = vpop.permute.xlu0 %2790
        %2792 = vrot.lane.b32.xlu0 %v2746, 96
        %v2793 = vpop.permute.xlu0 %2792
        %2794 = vrot.lane.b32.xlu0 %v2747, 96
        %v2795 = vpop.permute.xlu0 %2794
        %v2796 = vsel %vm1014, %v2765, %v2767
        %v2797 = vsel %vm1014, %v2767, %v2769
        %v2798 = vsel %vm1014, %v2769, %v2771
        %v2799 = vsel %vm1014, %v2773, %v2775
        %v2800 = vsel %vm1014, %v2775, %v2777
        %v2801 = vsel %vm1014, %v2777, %v2779
        %v2802 = vsel %vm1014, %v2781, %v2783
        %v2803 = vsel %vm1014, %v2783, %v2785
        %v2804 = vsel %vm1014, %v2785, %v2787
        %v2805 = vsel %vm1014, %v2789, %v2791
        %v2806 = vsel %vm1014, %v2791, %v2793
        %v2807 = vsel %vm1014, %v2793, %v2795
        %v2828 = vadd.f32 %v2469, %v2765
        %v2829 = vadd.f32 %v2470, %v2796
        %v2830 = vadd.f32 %v2471, %v2797
        %v2831 = vadd.f32 %v2472, %v2798
        %v2832 = vadd.f32 %v2473, %v2771
        %v2833 = vadd.f32 %v2474, %v2773
        %v2834 = vadd.f32 %v2475, %v2799
        %v2835 = vadd.f32 %v2476, %v2800
        %v2836 = vadd.f32 %v2477, %v2801
        %v2837 = vadd.f32 %v2478, %v2779
        %v2838 = vadd.f32 %v2479, %v2781
        %v2839 = vadd.f32 %v2480, %v2802
        %v2840 = vadd.f32 %v2481, %v2803
        %v2841 = vadd.f32 %v2482, %v2804
        %v2842 = vadd.f32 %v2483, %v2787
        %v2843 = vadd.f32 %v2484, %v2789
        %v2844 = vadd.f32 %v2485, %v2805
        %v2845 = vadd.f32 %v2486, %v2806
        %v2846 = vadd.f32 %v2487, %v2807
        %v2847 = vadd.f32 %v2488, %v2795
        %v2848 = vxor.u32 %v2828, 2147483648
        %v2849 = vxor.u32 %v2829, 2147483648
        %v2850 = vxor.u32 %v2830, 2147483648
        %v2851 = vxor.u32 %v2831, 2147483648
        %v2852 = vxor.u32 %v2832, 2147483648
        %v2853 = vxor.u32 %v2833, 2147483648
        %v2854 = vxor.u32 %v2834, 2147483648
        %v2855 = vxor.u32 %v2835, 2147483648
        %v2856 = vxor.u32 %v2836, 2147483648
        %v2857 = vxor.u32 %v2837, 2147483648
        %v2858 = vxor.u32 %v2838, 2147483648
        %v2859 = vxor.u32 %v2839, 2147483648
        %v2860 = vxor.u32 %v2840, 2147483648
        %v2861 = vxor.u32 %v2841, 2147483648
        %v2862 = vxor.u32 %v2842, 2147483648
        %v2863 = vxor.u32 %v2843, 2147483648
        %v2864 = vxor.u32 %v2844, 2147483648
        %v2865 = vxor.u32 %v2845, 2147483648
        %v2866 = vxor.u32 %v2846, 2147483648
        %v2867 = vxor.u32 %v2847, 2147483648
        %v2868 = vmul.f32 %v2848, 1.442695
        %v2869 = vpow.pop %v2868
        %v2870 = vmul.f32 %v2849, 1.442695
        %v2871 = vpow.pop %v2870
        %v2872 = vmul.f32 %v2850, 1.442695
        %v2873 = vpow.pop %v2872
        %v2874 = vmul.f32 %v2851, 1.442695
        %v2875 = vpow.pop %v2874
        %v2876 = vmul.f32 %v2852, 1.442695
        %v2877 = vpow.pop %v2876
        %v2878 = vmul.f32 %v2853, 1.442695
        %v2879 = vpow.pop %v2878
        %v2880 = vmul.f32 %v2854, 1.442695
        %v2881 = vpow.pop %v2880
        %v2882 = vmul.f32 %v2855, 1.442695
        %v2883 = vpow.pop %v2882
        %v2884 = vmul.f32 %v2856, 1.442695
        %v2885 = vpow.pop %v2884
        %v2886 = vmul.f32 %v2857, 1.442695
        %v2887 = vpow.pop %v2886
        %v2888 = vmul.f32 %v2858, 1.442695
        %v2889 = vpow.pop %v2888
        %v2890 = vmul.f32 %v2859, 1.442695
        %v2891 = vpow.pop %v2890
        %v2892 = vmul.f32 %v2860, 1.442695
        %v2893 = vpow.pop %v2892
        %v2894 = vmul.f32 %v2861, 1.442695
        %v2895 = vpow.pop %v2894
        %v2896 = vmul.f32 %v2862, 1.442695
        %v2897 = vpow.pop %v2896
        %v2898 = vmul.f32 %v2863, 1.442695
        %v2899 = vpow.pop %v2898
        %v2900 = vmul.f32 %v2864, 1.442695
        %v2901 = vpow.pop %v2900
        %v2902 = vmul.f32 %v2865, 1.442695
        %v2903 = vpow.pop %v2902
        %v2904 = vmul.f32 %v2866, 1.442695
        %v2905 = vpow.pop %v2904
        %v2906 = vmul.f32 %v2867, 1.442695
        %v2907 = vpow.pop %v2906
        %v2908 = vadd.f32 %v2869, 1.0
        %v2909 = vadd.f32 %v2871, 1.0
        %v2910 = vadd.f32 %v2873, 1.0
        %v2911 = vadd.f32 %v2875, 1.0
        %v2912 = vadd.f32 %v2877, 1.0
        %v2913 = vadd.f32 %v2879, 1.0
        %v2914 = vadd.f32 %v2881, 1.0
        %v2915 = vadd.f32 %v2883, 1.0
        %v2916 = vadd.f32 %v2885, 1.0
        %v2917 = vadd.f32 %v2887, 1.0
        %v2918 = vadd.f32 %v2889, 1.0
        %v2919 = vadd.f32 %v2891, 1.0
        %v2920 = vadd.f32 %v2893, 1.0
        %v2921 = vadd.f32 %v2895, 1.0
        %v2922 = vadd.f32 %v2897, 1.0
        %v2923 = vadd.f32 %v2899, 1.0
        %v2924 = vadd.f32 %v2901, 1.0
        %v2925 = vadd.f32 %v2903, 1.0
        %v2926 = vadd.f32 %v2905, 1.0
        %v2927 = vadd.f32 %v2907, 1.0
        %v2928 = vrcp.pop %v2908
        %v2929 = vmul.f32 1.0, %v2928
        %v2930 = vrcp.pop %v2909
        %v2931 = vmul.f32 1.0, %v2930
        %v2932 = vrcp.pop %v2910
        %v2933 = vmul.f32 1.0, %v2932
        %v2934 = vrcp.pop %v2911
        %v2935 = vmul.f32 1.0, %v2934
        %v2936 = vrcp.pop %v2912
        %v2937 = vmul.f32 1.0, %v2936
        %v2938 = vrcp.pop %v2913
        %v2939 = vmul.f32 1.0, %v2938
        %v2940 = vrcp.pop %v2914
        %v2941 = vmul.f32 1.0, %v2940
        %v2942 = vrcp.pop %v2915
        %v2943 = vmul.f32 1.0, %v2942
        %v2944 = vrcp.pop %v2916
        %v2945 = vmul.f32 1.0, %v2944
        %v2946 = vrcp.pop %v2917
        %v2947 = vmul.f32 1.0, %v2946
        %v2948 = vrcp.pop %v2918
        %v2949 = vmul.f32 1.0, %v2948
        %v2950 = vrcp.pop %v2919
        %v2951 = vmul.f32 1.0, %v2950
        %v2952 = vrcp.pop %v2920
        %v2953 = vmul.f32 1.0, %v2952
        %v2954 = vrcp.pop %v2921
        %v2955 = vmul.f32 1.0, %v2954
        %v2956 = vrcp.pop %v2922
        %v2957 = vmul.f32 1.0, %v2956
        %v2958 = vrcp.pop %v2923
        %v2959 = vmul.f32 1.0, %v2958
        %v2960 = vrcp.pop %v2924
        %v2961 = vmul.f32 1.0, %v2960
        %v2962 = vrcp.pop %v2925
        %v2963 = vmul.f32 1.0, %v2962
        %v2964 = vrcp.pop %v2926
        %v2965 = vmul.f32 1.0, %v2964
        %v2966 = vrcp.pop %v2927
        %v2967 = vmul.f32 1.0, %v2966
        %v2968 = vadd.f32 %v2929, 1.0
        %v2969 = vadd.f32 %v2931, 1.0
        %v2970 = vadd.f32 %v2933, 1.0
        %v2971 = vadd.f32 %v2935, 1.0
        %v2972 = vadd.f32 %v2937, 1.0
        %v2973 = vadd.f32 %v2939, 1.0
        %v2974 = vadd.f32 %v2941, 1.0
        %v2975 = vadd.f32 %v2943, 1.0
        %v2976 = vadd.f32 %v2945, 1.0
        %v2977 = vadd.f32 %v2947, 1.0
        %v2978 = vadd.f32 %v2949, 1.0
        %v2979 = vadd.f32 %v2951, 1.0
        %v2980 = vadd.f32 %v2953, 1.0
        %v2981 = vadd.f32 %v2955, 1.0
        %v2982 = vadd.f32 %v2957, 1.0
        %v2983 = vadd.f32 %v2959, 1.0
        %v2984 = vadd.f32 %v2961, 1.0
        %v2985 = vadd.f32 %v2963, 1.0
        %v2986 = vadd.f32 %v2965, 1.0
        %v2987 = vadd.f32 %v2967, 1.0
        %3008 = vrot.lane.b32.xlu0 %v2968, 32
        %v3009 = vpop.permute.xlu0 %3008
        %3010 = vrot.lane.b32.xlu0 %v2969, 32
        %v3011 = vpop.permute.xlu0 %3010
        %3012 = vrot.lane.b32.xlu0 %v2970, 32
        %v3013 = vpop.permute.xlu0 %3012
        %3014 = vrot.lane.b32.xlu0 %v2971, 32
        %v3015 = vpop.permute.xlu0 %3014
        %3016 = vrot.lane.b32.xlu0 %v2972, 32
        %v3017 = vpop.permute.xlu0 %3016
        %3018 = vrot.lane.b32.xlu0 %v2973, 32
        %v3019 = vpop.permute.xlu0 %3018
        %3020 = vrot.lane.b32.xlu0 %v2974, 32
        %v3021 = vpop.permute.xlu0 %3020
        %3022 = vrot.lane.b32.xlu0 %v2975, 32
        %v3023 = vpop.permute.xlu0 %3022
        %3024 = vrot.lane.b32.xlu0 %v2976, 32
        %v3025 = vpop.permute.xlu0 %3024
        %3026 = vrot.lane.b32.xlu0 %v2977, 32
        %v3027 = vpop.permute.xlu0 %3026
        %3028 = vrot.lane.b32.xlu0 %v2978, 32
        %v3029 = vpop.permute.xlu0 %3028
        %3030 = vrot.lane.b32.xlu0 %v2979, 32
        %v3031 = vpop.permute.xlu0 %3030
        %3032 = vrot.lane.b32.xlu0 %v2980, 32
        %v3033 = vpop.permute.xlu0 %3032
        %3034 = vrot.lane.b32.xlu0 %v2981, 32
        %v3035 = vpop.permute.xlu0 %3034
        %3036 = vrot.lane.b32.xlu0 %v2982, 32
        %v3037 = vpop.permute.xlu0 %3036
        %3038 = vrot.lane.b32.xlu0 %v2983, 32
        %v3039 = vpop.permute.xlu0 %3038
        %3040 = vrot.lane.b32.xlu0 %v2984, 32
        %v3041 = vpop.permute.xlu0 %3040
        %3042 = vrot.lane.b32.xlu0 %v2985, 32
        %v3043 = vpop.permute.xlu0 %3042
        %3044 = vrot.lane.b32.xlu0 %v2986, 32
        %v3045 = vpop.permute.xlu0 %3044
        %3046 = vrot.lane.b32.xlu0 %v2987, 32
        %v3047 = vpop.permute.xlu0 %3046
        %v3048 = vsel %vm1636, %v3009, %v3011
        %v3049 = vsel %vm1636, %v3011, %v3013
        %v3050 = vsel %vm1636, %v3013, %v3015
        %v3051 = vsel %vm1636, %v3015, %v3017
        %v3052 = vsel %vm1636, %v3019, %v3021
        %v3053 = vsel %vm1636, %v3021, %v3023
        %v3054 = vsel %vm1636, %v3023, %v3025
        %v3055 = vsel %vm1636, %v3025, %v3027
        %v3056 = vsel %vm1636, %v3029, %v3031
        %v3057 = vsel %vm1636, %v3031, %v3033
        %v3058 = vsel %vm1636, %v3033, %v3035
        %v3059 = vsel %vm1636, %v3035, %v3037
        %v3060 = vsel %vm1636, %v3039, %v3041
        %v3061 = vsel %vm1636, %v3041, %v3043
        %v3062 = vsel %vm1636, %v3043, %v3045
        %v3063 = vsel %vm1636, %v3045, %v3047
        %v3080 = vmul.f32 %v214, %v3048
        %v3081 = vmul.f32 %v215, %v3049
        %v3082 = vmul.f32 %v216, %v3050
        %v3083 = vmul.f32 %v217, %v3051
        %v3084 = vmul.f32 %v220, %v3052
        %v3085 = vmul.f32 %v221, %v3053
        %v3086 = vmul.f32 %v222, %v3054
        %v3087 = vmul.f32 %v223, %v3055
        %v3088 = vmul.f32 %v226, %v3056
        %v3089 = vmul.f32 %v227, %v3057
        %v3090 = vmul.f32 %v228, %v3058
        %v3091 = vmul.f32 %v229, %v3059
        %v3092 = vmul.f32 %v232, %v3060
        %v3093 = vmul.f32 %v233, %v3061
        %v3094 = vmul.f32 %v234, %v3062
        %v3095 = vmul.f32 %v235, %v3063
        %3096 = vst [vmem:[%s150] sm:$0xff] %v3080
        %3097 = vst [vmem:[%s150 + $0x8] sm:$0xff] %v3081
        %3098 = vst [vmem:[%s150 + $0x10] sm:$0xff] %v3082
        %3099 = vst [vmem:[%s150 + $0x18] sm:$0xff] %v3083
        %3100 = vst [vmem:[%s150 + $0x20] sm:$0xff] %v3084
        %3101 = vst [vmem:[%s150 + $0x28] sm:$0xff] %v3085
        %3102 = vst [vmem:[%s150 + $0x30] sm:$0xff] %v3086
        %3103 = vst [vmem:[%s150 + $0x38] sm:$0xff] %v3087
        %3104 = vst [vmem:[%s150 + $0x40] sm:$0xff] %v3088
        %3105 = vst [vmem:[%s150 + $0x48] sm:$0xff] %v3089
        %3106 = vst [vmem:[%s150 + $0x50] sm:$0xff] %v3090
        %3107 = vst [vmem:[%s150 + $0x58] sm:$0xff] %v3091
        %3108 = vst [vmem:[%s150 + $0x60] sm:$0xff] %v3092
        %3109 = vst [vmem:[%s150 + $0x68] sm:$0xff] %v3093
        %3110 = vst [vmem:[%s150 + $0x70] sm:$0xff] %v3094
        %3111 = vst [vmem:[%s150 + $0x78] sm:$0xff] %v3095
        %s3112 = sand.u32 %s82, 1
        %s3113 = scalar_lea.sflag [#allocation5], %s3112
        %s3114 = sand.u32 %s82, 1
        %s3115 = smul.addr %s3114, 128
        %s3116 = scalar_lea.vmem [#allocation7], %s3115
        // Predicated region
        $region37: #{tpu_custom_call.1} parent=27 // pred_check
          %p3117 = pneg %p92
        $region38: #{tpu_custom_call.1} parent=27 // pred_check_branch
          %3119 = sbr.rel (%p3117) target = $region40
        $region39: #{tpu_custom_call.1} parent=27 // pred_region
          %s3120 = smul.u32 4, %s23
          %s3122 = ssub.s32 2048, 2048
          %3123 = vsyncadd %s3113, %s3122
          %s3124 = smul.addr %s3120, 4
          %s3125 = smul.addr %s22, 32
          %s3126 = sadd.s32 %s3124, %s3125
          %s3127 = smul.addr %s3126, 128
          %s3128 = scalar_lea.hbm %s3, %s3127
          %s3129 = sshll.u32 %s3116, 4
          %s3130 = int_to_ptr.vmem [resolvable:$true] %s3129
          %3135 = dma.vmem_to_hbm [thread:$0]  %s3130, 2048, %s3128, %s3113, 512, 512, 32
        $region40: #{tpu_custom_call.1} parent=27 // pred_fallthru
          _
      $region28: #{tpu_custom_call.1} parent=5 // pred_fallthru
        _
      %p3136 = scmp.le.s32.totalorder 2, %s13
      // Predicated region
      $region41: #{tpu_custom_call.1} parent=5 // pred_check
        %p3137 = pneg %p3136
      $region42: #{tpu_custom_call.1} parent=5 // pred_check_branch
        %3139 = sbr.rel (%p3137) target = $region44
      $region43: #{tpu_custom_call.1} parent=5 // pred_region
        %s3140 = ssub.s32 %s13, 2
        // Predicated region
        $region45: #{tpu_custom_call.1} parent=43 // pred_check
          %p3141 = pneg %p98
        $region46: #{tpu_custom_call.1} parent=43 // pred_check_branch
          %3143 = sbr.rel (%p3141) target = $region48
        $region47: #{tpu_custom_call.1} parent=43 // pred_region
          %s3144 = sand.u32 %s83, 1
          %s3145 = scalar_lea.sflag [#allocation5], %s3144
          %s3146 = sand.u32 %s83, 1
          %s3147 = smul.addr %s3146, 128
          %s3148 = scalar_lea.vmem [#allocation7], %s3147
          %3149 = dma.done %s3145, 2048
        $region48: #{tpu_custom_call.1} parent=43 // pred_fallthru
          _
      $region44: #{tpu_custom_call.1} parent=5 // pred_fallthru
        _
    $region6: #{tpu_custom_call.1} parent=1 // loop_footer
      %s17 = sadd.s32 1, %s13
    $region7: #{tpu_custom_call.1} parent=1 // loop_footer_branch
      %12 = sbr.rel target = $region3
    $region8: #{tpu_custom_call.1} parent=1 // loop_exit
      _
    %3150 = vsyncpa [#allocation5], 1
    %s3151 = scalar_lea.sflag [#allocation5], 1
    %3152 = vsyncpa %s3151, 1
    %3153 = vsyncpa [#allocation6], 1
    %s3154 = scalar_lea.sflag [#allocation6], 1
    %3155 = vsyncpa %s3154, 1
  %3156 = vsyncmov [#allocation3]
  %s3157 = vpop.sfrf %3156
  %p3158 = scmp.eq.s32.totalorder %s3157, 0
  %p3159 = pneg %p3158
  %3161 = shalt.err (%p3159)

</llo_original>
